<compile_context>
chip_gen: v6e
topology: v6e:2x2x1
jax: 0.10.0
libtpu: 0.0.40
codegen_flags: <defaults>
</compile_context>

<pallas_src>
import functools

import jax
import jax.numpy as jnp
from jax.experimental import pallas as pl
from jax.experimental.pallas import tpu as pltpu

KH = KW = 7
STRIDE = 2
PAD = 3
POOL_K, POOL_S, POOL_P = 3, 2, 1


def _stem_kernel(p_ref, w_ref, shift_ref, o_ref, carry_ref, *, tp, po_w, cout):
    # p_ref:     (1, 2*tp*wo, K)     bf16 im2col patches, rows ordered
    #                                (conv row, col parity, pooled col j)
    # w_ref:     (K, cout)           bf16, frozen-BN scale folded into columns
    # shift_ref: (1, cout)           f32 frozen-BN shift
    # o_ref:     (1, tp, po_w*cout)  f32 lane-dense pooled output tile
    # carry_ref: (1, 2, po_w, cout)  f32 scratch: last conv row of previous tile
    t = pl.program_id(1)

    # Top pool border for the first tile of every image (post-ReLU >= 0, so a
    # zero row is equivalent to max-pool's -inf padding).
    @pl.when(t == 0)
    def _():
        carry_ref[...] = jnp.zeros_like(carry_ref)

    # Conv rows [2*t*tp, 2*t*tp + 2*tp) as a single MXU matmul (bf16 x bf16,
    # f32 accumulate) + BN shift + ReLU.
    y = jnp.dot(p_ref[0], w_ref[...], preferred_element_type=jnp.float32)
    y = jnp.maximum(y + shift_ref[...], 0.0)          # (2*tp*wo, cout), >= 0

    # Index layout (pooled row i, conv-row parity p, conv-col parity q, pooled
    # col j, channel):   y5[i, p, q, j] = conv(row 2i+p, col 2j+q).
    y5 = y.reshape(tp, 2, 2, po_w, cout)
    row_e = y5[:, 0]                                  # conv rows 2i
    row_o = y5[:, 1]                                  # conv rows 2i+1

    # --- vertical (row) pool: max over conv rows 2i-1, 2i, 2i+1 --------------
    prev_top = carry_ref[...]                         # conv row 2*t*tp - 1
    carry_ref[...] = row_o[tp - 1:tp]                 # carry for the next tile
    if tp > 1:
        prev_rows = jnp.concatenate([prev_top, row_o[:tp - 1]], axis=0)
    else:
        prev_rows = prev_top
    rmax = jnp.maximum(jnp.maximum(row_e, row_o), prev_rows)   # (tp, 2, po_w, cout)

    # --- horizontal (col) pool: max over conv cols 2j-1, 2j, 2j+1 -------------
    col_e = rmax[:, 0]                                # conv cols 2j
    col_o = rmax[:, 1]                                # conv cols 2j+1
    zero_col = jnp.zeros((tp, 1, cout), jnp.float32)  # left border (post-ReLU)
    if po_w > 1:
        prev_cols = jnp.concatenate([zero_col, col_o[:, :po_w - 1, :]], axis=1)
    else:
        prev_cols = zero_col
    pooled = jnp.maximum(jnp.maximum(col_e, col_o), prev_cols)  # (tp, po_w, cout)

    # Single dense, lane-dense store.
    o_ref[0] = pooled.reshape(tp, po_w * cout)


def base_stem_forward(x_nchw, conv_w, bn_scale, bn_shift):
    """x_nchw: (N, 3, H, W) f32. conv_w: (Cout, 3, 7, 7) PyTorch OIHW.
    bn_scale / bn_shift: (Cout,). Returns (N, Cout, H//4, W//4) NCHW f32."""
    N, cin, H, W = x_nchw.shape
    assert cin == 3
    assert H % 4 == 0 and W % 4 == 0, (
        "TODO(synk): general H/W needs bottom/right pool-edge masking")
    cout = conv_w.shape[0]
    ho, wo = H // 2, W // 2
    po_h, po_w = ho // 2, wo // 2
    K = KH * KW * cin

    # Pooled rows per grid step. TP=8 keeps per-step VMEM small enough for v7x
    # (64 MiB) at production widths; raise on v5e/v6e if DMA is exposed.
    tp = 8 if po_h % 8 == 0 else po_h
    num_row_tiles = po_h // tp

    # ---- glue: NCHW -> NHWC, zero-pad, im2col (bf16 operands) ----------------
    x = jnp.transpose(x_nchw, (0, 2, 3, 1)).astype(jnp.float32)
    xp = jnp.pad(x, ((0, 0), (PAD, PAD), (PAD, PAD), (0, 0)))
    taps = []
    for kh in range(KH):
        for kw in range(KW):
            taps.append(xp[:, kh:kh + STRIDE * ho:STRIDE,
                             kw:kw + STRIDE * wo:STRIDE, :])          # (N, ho, wo, cin)
    pat = jnp.stack(taps, axis=3).reshape(N, ho, wo, K)
    # Reorder conv columns to parity-major (even cols, then odd cols) so the
    # in-kernel pool only needs contiguous outer-dim slices.
    pat = pat.reshape(N, ho, po_w, 2, K).transpose(0, 1, 3, 2, 4)
    pat = pat.reshape(N, ho * wo, K).astype(jnp.bfloat16)

    # Weight flattened (kh, kw, cin)-major (matches patch ordering); fold the
    # frozen-BN scale into the columns in f32, then cast to bf16.
    w_mat = jnp.transpose(conv_w, (2, 3, 1, 0)).reshape(K, cout).astype(jnp.float32)
    w_mat = (w_mat * bn_scale.reshape(1, cout).astype(jnp.float32)).astype(jnp.bfloat16)
    shift2d = bn_shift.reshape(1, cout).astype(jnp.float32)

    # ---- Pallas kernel over (batch, pooled-row tiles) -------------------------
    kernel = functools.partial(_stem_kernel, tp=tp, po_w=po_w, cout=cout)
    out = pl.pallas_call(
        kernel,
        out_shape=jax.ShapeDtypeStruct((N, po_h, po_w * cout), jnp.float32),
        grid=(N, num_row_tiles),
        in_specs=[
            pl.BlockSpec((1, 2 * tp * wo, K), lambda n, t: (n, t, 0)),
            pl.BlockSpec((K, cout), lambda n, t: (0, 0)),
            pl.BlockSpec((1, cout), lambda n, t: (0, 0)),
        ],
        out_specs=pl.BlockSpec((1, tp, po_w * cout), lambda n, t: (n, t, 0)),
        scratch_shapes=[pltpu.VMEM((1, 2, po_w, cout), jnp.float32)],
        compiler_params=pltpu.CompilerParams(
            # Row-tile axis carries one conv row across steps -> "arbitrary";
            # batch stays "parallel" so v7x megacore can shard images.
            dimension_semantics=("parallel", "arbitrary"),
            vmem_limit_bytes=48 * 1024 * 1024),
    )(pat, w_mat, shift2d)

    out = out.reshape(N, po_h, po_w, cout)                            # lane-dense -> NHWC
    return jnp.transpose(out, (0, 3, 1, 2))                           # back to NCHW


if __name__ == "__main__":
    import numpy as np

    key = jax.random.PRNGKey(0)
    k_x, k_w, k_g, k_b, k_m, k_v = jax.random.split(key, 6)

    # 64x64 so the pooled-row tiling (tp=8, 2 row tiles) and the cross-tile
    # carry path are actually exercised.
    N, Cin, H, W = 2, 3, 64, 64
    Cout = 64  # cfg.MODEL.RESNETS.STEM_OUT_CHANNELS (default)

    x = jax.random.normal(k_x, (N, Cin, H, W), jnp.float32)

    # Conv2d(3, Cout, 7, stride=2, padding=3, bias=False), kaiming_uniform_(a=1)
    fan_in = Cin * KH * KW
    bound = (3.0 / fan_in) ** 0.5
    conv_w = jax.random.uniform(k_w, (Cout, Cin, KH, KW), jnp.float32, -bound, bound)

    # Frozen-BN parameters folded into per-channel scale / shift.
    gamma = jax.random.uniform(k_g, (Cout,), jnp.float32, 0.5, 1.5)
    beta = 0.1 * jax.random.normal(k_b, (Cout,), jnp.float32)
    mean = 0.1 * jax.random.normal(k_m, (Cout,), jnp.float32)
    var = jax.random.uniform(k_v, (Cout,), jnp.float32, 0.5, 1.5)
    eps = 1e-5
    bn_scale = gamma / jnp.sqrt(var + eps)
    bn_shift = beta - mean * bn_scale

    out = jax.block_until_ready(base_stem_forward(x, conv_w, bn_scale, bn_shift))
    assert out.shape == (N, Cout, H // 4, W // 4), out.shape

    def _pool(t):
        return jax.lax.reduce_window(
            t, -jnp.inf, jax.lax.max,
            window_dimensions=(1, 1, POOL_K, POOL_K),
            window_strides=(1, 1, POOL_S, POOL_S),
            padding=((0, 0), (0, 0), (POOL_P, POOL_P), (POOL_P, POOL_P)))

    # Reference 1: bf16-matched (same scale-folded bf16 weights, f32 accumulate)
    # -> tight tolerance; catches im2col ordering / tiling / carry / pool bugs.
    w_folded = conv_w * bn_scale[:, None, None, None]
    ref_t = jax.lax.conv_general_dilated(
        x.astype(jnp.bfloat16), w_folded.astype(jnp.bfloat16),
        window_strides=(STRIDE, STRIDE), padding=((PAD, PAD), (PAD, PAD)),
        dimension_numbers=("NCHW", "OIHW", "NCHW"),
        preferred_element_type=jnp.float32)
    ref_t = jnp.maximum(ref_t + bn_shift[None, :, None, None], 0.0)
    ref_t = _pool(ref_t)
    np.testing.assert_allclose(np.asarray(out), np.asarray(ref_t), rtol=1e-3, atol=1e-3)

    # Reference 2: pure-f32 PyTorch semantics -> loose tolerance (bf16 matmul operands).
    ref = jax.lax.conv_general_dilated(
        x, conv_w, window_strides=(STRIDE, STRIDE),
        padding=((PAD, PAD), (PAD, PAD)),
        dimension_numbers=("NCHW", "OIHW", "NCHW"))
    ref = ref * bn_scale[None, :, None, None] + bn_shift[None, :, None, None]
    ref = jnp.maximum(ref, 0.0)
    ref = _pool(ref)
    np.testing.assert_allclose(np.asarray(out), np.asarray(ref), rtol=5e-2, atol=5e-2)

    print("KERNEL_OK")
</pallas_src>

<mosaic_0001>
module attributes {stable_mosaic.version = 11 : i64} {
  func.func @_stem_kernel(%arg0: i32, %arg1: i32, %arg2: memref<1x512x147xbf16, #tpu.memory_space<vmem>>, %arg3: memref<147x64xbf16, #tpu.memory_space<vmem>>, %arg4: memref<1x64xf32, #tpu.memory_space<vmem>>, %arg5: memref<1x8x1024xf32, #tpu.memory_space<vmem>>, %arg6: memref<1x2x16x64xf32, #tpu.memory_space<vmem>>) attributes {dimension_semantics = [#tpu.dimension_semantics<parallel>, #tpu.dimension_semantics<arbitrary>], iteration_bounds = array<i64: 2, 2>, scalar_prefetch = 0 : i64, scratch_operands = 1 : i64, tpu.core_type = #tpu.core_type<tc>, window_params = [{transform_indices = @transform_0, window_bounds = array<i64: 1, 512, 147>}, {pipeline_mode = #tpu.pipeline_mode<synchronous>, transform_indices = @transform_1, window_bounds = array<i64: 147, 64>}, {pipeline_mode = #tpu.pipeline_mode<synchronous>, transform_indices = @transform_2, window_bounds = array<i64: 1, 64>}, {transform_indices = @transform_3, window_bounds = array<i64: 1, 8, 1024>}]} {
    %c0_i32 = arith.constant 0 : i32
    %0 = arith.cmpi eq, %arg1, %c0_i32 : i32
    %1 = arith.extui %0 : i1 to i32
    %c0_i32_0 = arith.constant 0 : i32
    %2 = arith.cmpi ne, %1, %c0_i32_0 : i32
    scf.if %2 {
      %cst_20 = arith.constant 0.000000e+00 : f32
      %37 = vector.broadcast %cst_20 : f32 to vector<1x2x16x64xf32>
      %c0_21 = arith.constant 0 : index
      %c0_22 = arith.constant 0 : index
      %c0_23 = arith.constant 0 : index
      %c0_24 = arith.constant 0 : index
      %38 = vector.load %arg6[%c0_21, %c0_22, %c0_23, %c0_24] : memref<1x2x16x64xf32, #tpu.memory_space<vmem>>, vector<1x2x16x64xf32>
      tpu.vector_store %arg6[%c0_21, %c0_22, %c0_23, %c0_24], %37 {strides = array<i32>} : memref<1x2x16x64xf32, #tpu.memory_space<vmem>>, vector<1x2x16x64xf32>,
    } else {
    }
    %c0 = arith.constant 0 : index
    %c0_1 = arith.constant 0 : index
    %c0_2 = arith.constant 0 : index
    %3 = vector.load %arg2[%c0, %c0_1, %c0_2] : memref<1x512x147xbf16, #tpu.memory_space<vmem>>, vector<1x512x147xbf16>
    %4 = vector.shape_cast %3 : vector<1x512x147xbf16> to vector<512x147xbf16>
    %c0_3 = arith.constant 0 : index
    %c0_4 = arith.constant 0 : index
    %5 = vector.load %arg3[%c0_3, %c0_4] : memref<147x64xbf16, #tpu.memory_space<vmem>>, vector<147x64xbf16>
    %cst = arith.constant dense<0.000000e+00> : vector<512x64xf32>
    %6 = tpu.matmul %4, %5, %cst {dimension_numbers = #tpu.dot_dimension_numbers<[1], [0], [0], [1], [0, 0, 1, 1], [], []>} : vector<512x147xbf16>, vector<147x64xbf16>, vector<512x64xf32> -> vector<512x64xf32>
    %c0_5 = arith.constant 0 : index
    %c0_6 = arith.constant 0 : index
    %7 = vector.load %arg4[%c0_5, %c0_6] : memref<1x64xf32, #tpu.memory_space<vmem>>, vector<1x64xf32>
    %8 = vector.broadcast %7 : vector<1x64xf32> to vector<512x64xf32>
    %9 = arith.addf %6, %8 : vector<512x64xf32>
    %cst_7 = arith.constant 0.000000e+00 : f32
    %10 = vector.broadcast %cst_7 : f32 to vector<512x64xf32>
    %11 = arith.maximumf %9, %10 : vector<512x64xf32>
    %12 = vector.shape_cast %11 : vector<512x64xf32> to vector<8x2x2x16x64xf32>
    %13 = vector.extract_strided_slice %12 {offsets = [0, 0, 0, 0, 0], sizes = [8, 1, 2, 16, 64], strides = [1, 1, 1, 1, 1]} : vector<8x2x2x16x64xf32> to vector<8x1x2x16x64xf32>
    %14 = vector.shape_cast %13 : vector<8x1x2x16x64xf32> to vector<8x2x16x64xf32>
    %15 = vector.extract_strided_slice %12 {offsets = [0, 1, 0, 0, 0], sizes = [8, 1, 2, 16, 64], strides = [1, 1, 1, 1, 1]} : vector<8x2x2x16x64xf32> to vector<8x1x2x16x64xf32>
    %16 = vector.shape_cast %15 : vector<8x1x2x16x64xf32> to vector<8x2x16x64xf32>
    %c0_8 = arith.constant 0 : index
    %c0_9 = arith.constant 0 : index
    %c0_10 = arith.constant 0 : index
    %c0_11 = arith.constant 0 : index
    %17 = vector.load %arg6[%c0_8, %c0_9, %c0_10, %c0_11] : memref<1x2x16x64xf32, #tpu.memory_space<vmem>>, vector<1x2x16x64xf32>
    %18 = vector.extract_strided_slice %16 {offsets = [7, 0, 0, 0], sizes = [1, 2, 16, 64], strides = [1, 1, 1, 1]} : vector<8x2x16x64xf32> to vector<1x2x16x64xf32>
    %c0_12 = arith.constant 0 : index
    %c0_13 = arith.constant 0 : index
    %c0_14 = arith.constant 0 : index
    %c0_15 = arith.constant 0 : index
    %19 = vector.load %arg6[%c0_12, %c0_13, %c0_14, %c0_15] : memref<1x2x16x64xf32, #tpu.memory_space<vmem>>, vector<1x2x16x64xf32>
    tpu.vector_store %arg6[%c0_12, %c0_13, %c0_14, %c0_15], %18 {strides = array<i32>} : memref<1x2x16x64xf32, #tpu.memory_space<vmem>>, vector<1x2x16x64xf32>,
    %20 = vector.extract_strided_slice %16 {offsets = [0, 0, 0, 0], sizes = [7, 2, 16, 64], strides = [1, 1, 1, 1]} : vector<8x2x16x64xf32> to vector<7x2x16x64xf32>
    %21 = tpu.concatenate %17, %20 in 0 : vector<1x2x16x64xf32>, vector<7x2x16x64xf32> -> vector<8x2x16x64xf32>
    %22 = arith.maximumf %14, %16 : vector<8x2x16x64xf32>
    %23 = arith.maximumf %22, %21 : vector<8x2x16x64xf32>
    %24 = vector.extract_strided_slice %23 {offsets = [0, 0, 0, 0], sizes = [8, 1, 16, 64], strides = [1, 1, 1, 1]} : vector<8x2x16x64xf32> to vector<8x1x16x64xf32>
    %25 = vector.shape_cast %24 : vector<8x1x16x64xf32> to vector<8x16x64xf32>
    %26 = vector.extract_strided_slice %23 {offsets = [0, 1, 0, 0], sizes = [8, 1, 16, 64], strides = [1, 1, 1, 1]} : vector<8x2x16x64xf32> to vector<8x1x16x64xf32>
    %27 = vector.shape_cast %26 : vector<8x1x16x64xf32> to vector<8x16x64xf32>
    %cst_16 = arith.constant 0.000000e+00 : f32
    %28 = vector.broadcast %cst_16 : f32 to vector<8x1x64xf32>
    %29 = vector.extract_strided_slice %27 {offsets = [0, 0, 0], sizes = [8, 15, 64], strides = [1, 1, 1]} : vector<8x16x64xf32> to vector<8x15x64xf32>
    %30 = tpu.concatenate %28, %29 in 1 : vector<8x1x64xf32>, vector<8x15x64xf32> -> vector<8x16x64xf32>
    %31 = arith.maximumf %25, %27 : vector<8x16x64xf32>
    %32 = arith.maximumf %31, %30 : vector<8x16x64xf32>
    %33 = vector.shape_cast %32 : vector<8x16x64xf32> to vector<8x1024xf32>
    %c0_17 = arith.constant 0 : index
    %c0_18 = arith.constant 0 : index
    %c0_19 = arith.constant 0 : index
    %34 = vector.load %arg5[%c0_17, %c0_18, %c0_19] : memref<1x8x1024xf32, #tpu.memory_space<vmem>>, vector<1x8x1024xf32>
    %35 = vector.shape_cast %34 : vector<1x8x1024xf32> to vector<8x1024xf32>
    %36 = vector.shape_cast %33 : vector<8x1024xf32> to vector<1x8x1024xf32>
    tpu.vector_store %arg5[%c0_17, %c0_18, %c0_19], %36 {strides = array<i32>} : memref<1x8x1024xf32, #tpu.memory_space<vmem>>, vector<1x8x1024xf32>,
    return
  }
  func.func @transform_0(%arg0: i32, %arg1: i32) -> (i32, i32, i32) {
    %c0_i32 = arith.constant 0 : i32
    %c0_i32_0 = arith.constant 0 : i32
    return %arg0, %arg1, %c0_i32 : i32, i32, i32
  }
  func.func @transform_1(%arg0: i32, %arg1: i32) -> (i32, i32) {
    %c0_i32 = arith.constant 0 : i32
    %c0_i32_0 = arith.constant 0 : i32
    %c0_i32_1 = arith.constant 0 : i32
    return %c0_i32, %c0_i32_0 : i32, i32
  }
  func.func @transform_2(%arg0: i32, %arg1: i32) -> (i32, i32) {
    %c0_i32 = arith.constant 0 : i32
    %c0_i32_0 = arith.constant 0 : i32
    %c0_i32_1 = arith.constant 0 : i32
    return %c0_i32, %c0_i32_0 : i32, i32
  }
  func.func @transform_3(%arg0: i32, %arg1: i32) -> (i32, i32, i32) {
    %c0_i32 = arith.constant 0 : i32
    %c0_i32_0 = arith.constant 0 : i32
    return %arg0, %arg1, %c0_i32 : i32, i32, i32
  }
}

</mosaic_0001>

<llo_original>
// kernel: tpu_custom_call.1
$region0: #{tpu_custom_call.1}
  #allocation0 [shape = 'u32[]', space=smem, size = 0x4, offset = 0x4, fixed_abs, tag = 'smem constant byte address 0x4 - core index']
  #allocation1 [shape = 'u32[144,128]{1,0:T(1,128)}', space=vmem, size = 0x12000, scoped, tag = 'internal scratch']
  #allocation2 [shape = 'f32[1,2,16,64]{3,2,1,0:T(8,128)}', space=vmem, size = 0x4000, scoped, tag = 'scratch operand']
  %s0 = inlined_call_operand.vmem [shape: bf16[2,1024,147], index: 0, kind: input, shape index: {}]
  %s1 = inlined_call_operand.vmem [shape: bf16[147,64], index: 1, kind: input, shape index: {}]
  %s2 = inlined_call_operand.vmem [shape: f32[1,64], index: 2, kind: input, shape index: {}]
  %s3 = inlined_call_operand.hbm [shape: f32[2,16,1024], index: 3, kind: output, shape index: {}]
  %s4 = sld [smem:[#allocation0]]
  $region49: #{tpu_custom_call.1} parent=0
    _
  %s6 = ssub.s32 1, %s4
  %s7 = scalar_select 0, %s6, %s4
  $region1: #{tpu_custom_call.1} parent=0
    #allocation3 [shape = 'u8[65536]{0}', space=vmem, size = 0x10000, scoped, tag = 'output window, operand 0']
    #allocation4 [shape = 's32[2]{0}', space=sflag, size = 0x8, scoped, tag = 'scoped memory for tpu_custom_call.1']
    %8 = vsyncpa [#allocation4], 0
    %s9 = scalar_lea.sflag [#allocation4], 1
    %10 = vsyncpa %s9, 0
    loop: start=0, step=1, limit=6
    $region2: #{tpu_custom_call.1} parent=1 // loop_pre_header
      _
    $region3: #{tpu_custom_call.1} parent=1 // loop_header
      %s12 = sphi 0, %s16
      %p13 = scmp.ge.s32.totalorder %s12, 6
      %s19 = sphi 0, %s31
      %s20 = sphi 0, %s27
      %s21 = sphi 0, %s19
      %s22 = sphi 0, %s20
      %s23 = sphi 0, %s21
      %s24 = sphi 0, %s22
      %s36 = sphi 0, %s38
      %s39 = sphi 0, %s36
      %s40 = sphi 0, %s39
      %s56 = sphi 0, %s40
      %s60 = sphi 0, %s60
      %s62 = sphi 0, %s60
      %s63 = sphi 0, %s62
      %s77 = sphi 0, %s63
      %s81 = sphi 0, %s81
      %s83 = sphi 0, %s81
      %s84 = sphi 0, %s83
      %s98 = sphi 0, %s84
      %s106 = sphi 0, %s108
      %s109 = sphi 0, %s106
      %s110 = sphi 0, %s109
      %s126 = sphi 0, %s110
    $region4: #{tpu_custom_call.1} parent=1 // loop_header_branch
      %15 = sbr.rel (%p13) target = $region8
    $region5: #{tpu_custom_call.1} parent=1 // loop_body
      %s17 = ssub.s32 %s12, 1
      %s18 = ssub.s32 %s12, 2
      %s25 = sadd.s32 1, %s20
      %p26 = scmp.ge.s32.totalorder %s25, 2
      %s27 = scalar_select %p26, 0, %s25
      %s28 = sadd.s32 1, %s19
      %s29 = scalar_select %p26, %s28, %s19
      %p30 = scmp.ge.s32.totalorder %s29, 2
      %s31 = scalar_select %p30, 0, %s29
      %s32 = ssub.s32 %s19, %s31
      %s33 = ssub.s32 %s20, %s27
      %s34 = sor.u32 %s32, %s33
      %p35 = scmp.eq.s32.totalorder %s34, 0
      %s37 = sadd.s32 %s36, 1
      %s38 = scalar_select %p35, %s36, %s37
      %p41 = pneg %p35
      %p42 = scmp.eq.s32.totalorder %s12, 3
      %p43 = por %p41, %p42
      %p44 = scmp.ne.s32.totalorder %s36, %s39
      %p45 = scmp.eq.s32.totalorder %s12, 0
      %p46 = por %p44, %p45
      %p47 = scmp.ne.s32.totalorder %s36, %s39
      %p48 = scmp.eq.s32.totalorder %s17, 3
      %p49 = por %p47, %p48
      %p50 = scmp.ne.s32.totalorder %s39, %s40
      %p51 = scmp.eq.s32.totalorder %s17, 0
      %p52 = por %p50, %p51
      %p53 = scmp.ne.s32.totalorder %s39, %s40
      %p54 = scmp.eq.s32.totalorder %s18, 3
      %p55 = por %p53, %p54
      %p57 = scmp.ne.s32.totalorder %s40, %s56
      %p58 = scmp.eq.s32.totalorder %s18, 0
      %p59 = por %p57, %p58
      %s61 = sadd.s32 %s60, 1
      %p64 = scmp.eq.s32.totalorder %s12, 3
      %p65 = scmp.ne.s32.totalorder %s60, %s62
      %p66 = scmp.eq.s32.totalorder %s12, 0
      %p67 = por %p65, %p66
      %p68 = scmp.ne.s32.totalorder %s60, %s62
      %p69 = scmp.eq.s32.totalorder %s17, 3
      %p70 = por %p68, %p69
      %p71 = scmp.ne.s32.totalorder %s62, %s63
      %p72 = scmp.eq.s32.totalorder %s17, 0
      %p73 = por %p71, %p72
      %p74 = scmp.ne.s32.totalorder %s62, %s63
      %p75 = scmp.eq.s32.totalorder %s18, 3
      %p76 = por %p74, %p75
      %p78 = scmp.ne.s32.totalorder %s63, %s77
      %p79 = scmp.eq.s32.totalorder %s18, 0
      %p80 = por %p78, %p79
      %s82 = sadd.s32 %s81, 1
      %p85 = scmp.eq.s32.totalorder %s12, 3
      %p86 = scmp.ne.s32.totalorder %s81, %s83
      %p87 = scmp.eq.s32.totalorder %s12, 0
      %p88 = por %p86, %p87
      %p89 = scmp.ne.s32.totalorder %s81, %s83
      %p90 = scmp.eq.s32.totalorder %s17, 3
      %p91 = por %p89, %p90
      %p92 = scmp.ne.s32.totalorder %s83, %s84
      %p93 = scmp.eq.s32.totalorder %s17, 0
      %p94 = por %p92, %p93
      %p95 = scmp.ne.s32.totalorder %s83, %s84
      %p96 = scmp.eq.s32.totalorder %s18, 3
      %p97 = por %p95, %p96
      %p99 = scmp.ne.s32.totalorder %s84, %s98
      %p100 = scmp.eq.s32.totalorder %s18, 0
      %p101 = por %p99, %p100
      %s102 = ssub.s32 %s19, %s31
      %s103 = ssub.s32 %s20, %s27
      %s104 = sor.u32 %s102, %s103
      %p105 = scmp.eq.s32.totalorder %s104, 0
      %s107 = sadd.s32 %s106, 1
      %s108 = scalar_select %p105, %s106, %s107
      %p111 = pneg %p105
      %p112 = scmp.eq.s32.totalorder %s12, 3
      %p113 = por %p111, %p112
      %p114 = scmp.ne.s32.totalorder %s106, %s109
      %p115 = scmp.eq.s32.totalorder %s12, 0
      %p116 = por %p114, %p115
      %p117 = scmp.ne.s32.totalorder %s106, %s109
      %p118 = scmp.eq.s32.totalorder %s17, 3
      %p119 = por %p117, %p118
      %p120 = scmp.ne.s32.totalorder %s109, %s110
      %p121 = scmp.eq.s32.totalorder %s17, 0
      %p122 = por %p120, %p121
      %p123 = scmp.ne.s32.totalorder %s109, %s110
      %p124 = scmp.eq.s32.totalorder %s18, 3
      %p125 = por %p123, %p124
      %p127 = scmp.ne.s32.totalorder %s110, %s126
      %p128 = scmp.eq.s32.totalorder %s18, 0
      %p129 = por %p127, %p128
      %p130 = scmp.le.s32.totalorder 1, %s12
      %p131 = scmp.lt.s32.totalorder %s12, 5
      %p132 = pnand %p130, %p131
      %p133 = pneg %p132
      // Predicated region
      $region9: #{tpu_custom_call.1} parent=5 // pred_check
        _
      $region10: #{tpu_custom_call.1} parent=5 // pred_check_branch
        %135 = sbr.rel (%p132) target = $region12
      $region11: #{tpu_custom_call.1} parent=5 // pred_region
        %s136 = ssub.s32 %s12, 1
        // Predicated region
        $region13: #{tpu_custom_call.1} parent=11 // pred_check
          %p137 = pneg %p73
        $region14: #{tpu_custom_call.1} parent=11 // pred_check_branch
          %139 = sbr.rel (%p137) target = $region16
        $region15: #{tpu_custom_call.1} parent=11 // pred_region
          _
        $region16: #{tpu_custom_call.1} parent=11 // pred_fallthru
          _
        // Predicated region
        $region17: #{tpu_custom_call.1} parent=11 // pred_check
          %p140 = pneg %p94
        $region18: #{tpu_custom_call.1} parent=11 // pred_check_branch
          %142 = sbr.rel (%p140) target = $region20
        $region19: #{tpu_custom_call.1} parent=11 // pred_region
          _
        $region20: #{tpu_custom_call.1} parent=11 // pred_fallthru
          _
      $region12: #{tpu_custom_call.1} parent=5 // pred_fallthru
        _
      %p143 = scmp.lt.s32.totalorder %s12, 4
      // Predicated region
      $region21: #{tpu_custom_call.1} parent=5 // pred_check
        %p144 = pneg %p143
      $region22: #{tpu_custom_call.1} parent=5 // pred_check_branch
        %146 = sbr.rel (%p144) target = $region24
      $region23: #{tpu_custom_call.1} parent=5 // pred_region
        // Predicated region
        $region25: #{tpu_custom_call.1} parent=23 // pred_check
          %p147 = pneg %p46
        $region26: #{tpu_custom_call.1} parent=23 // pred_check_branch
          %149 = sbr.rel (%p147) target = $region28
        $region27: #{tpu_custom_call.1} parent=23 // pred_region
          %s150 = smul.u32 64, %s20
          %p151 = scmp.lt.s32.totalorder %s19, 1
          %s152 = scalar_select %p151, %s19, 1
          %p153 = scmp.lt.s32.totalorder %s150, 127
          %s154 = scalar_select %p153, %s150, 127
          %s155 = smul.addr %s154, 2
          %s156 = smul.addr %s152, 256
          %s157 = sadd.s32 %s155, %s156
          %s158 = smul.addr %s157, 4
          %s159 = scalar_lea.vmem %s0, %s158
          %s160 = smul.u32 64, %s20
        $region28: #{tpu_custom_call.1} parent=23 // pred_fallthru
          _
      $region24: #{tpu_custom_call.1} parent=5 // pred_fallthru
        _
      %p161 = scmp.le.s32.totalorder 1, %s12
      %p162 = scmp.lt.s32.totalorder %s12, 5
      %p163 = pnand %p161, %p162
      %p164 = pneg %p163
      // Predicated region
      $region29: #{tpu_custom_call.1} parent=5 // pred_check
        _
      $region30: #{tpu_custom_call.1} parent=5 // pred_check_branch
        %166 = sbr.rel (%p163) target = $region32
      $region31: #{tpu_custom_call.1} parent=5 // pred_region
        %s167 = ssub.s32 %s12, 1
        %s168 = smul.u32 64, %s22
        %p169 = scmp.lt.s32.totalorder %s21, 1
        %s170 = scalar_select %p169, %s21, 1
        %p171 = scmp.lt.s32.totalorder %s168, 127
        %s172 = scalar_select %p171, %s168, 127
        %s173 = smul.addr %s172, 2
        %s174 = smul.addr %s170, 256
        %s175 = sadd.s32 %s173, %s174
        %s176 = smul.addr %s175, 4
        %s177 = scalar_lea.vmem %s0, %s176
        %p178 = pneg %p52
        %p179 = pneg %p49
        %p180 = pneg %p73
        %p181 = pneg %p70
        %p182 = pneg %p94
        %p183 = pneg %p91
        %p184 = pneg %p122
        %p185 = pneg %p119
        %s186 = sand.u32 %s109, 1
        %s187 = scalar_lea.sflag [#allocation4], %s186
        %s188 = sand.u32 %s109, 1
        %s189 = smul.addr %s188, 64
        %s190 = scalar_lea.vmem [#allocation3], %s189
        %s191 = smul.u32 64, %s22
        %p192 = scmp.lt.s32.totalorder %s21, 1
        %s193 = scalar_select %p192, %s21, 1
        %p194 = scmp.lt.s32.totalorder %s191, 127
        %s195 = scalar_select %p194, %s191, 127
        %s196 = smul.addr %s195, 2
        %s197 = smul.addr %s193, 256
        %s198 = sadd.s32 %s196, %s197
        %s199 = smul.addr %s198, 4
        %s200 = scalar_lea.vmem %s0, %s199
        %s201 = smul.u32 64, %s22
        %p203 = scmp.eq.s32.totalorder %s22, 0
        // Predicated region
        $region33: #{tpu_custom_call.1} parent=31 // pred_check
          %p204 = pneg %p203
        $region34: #{tpu_custom_call.1} parent=31 // pred_check_branch
          %206 = sbr.rel (%p204) target = $region36
        $region35: #{tpu_custom_call.1} parent=31 // pred_region
          %vm207 = vcmask 523264
          %208 = vst.msk [vmem:[#allocation2] sm:$0xff] %vm207, 0.0
          %209 = vst.msk [vmem:[#allocation2 + $0x8] sm:$0xff] %vm207, 0.0
          %210 = vst.msk [vmem:[#allocation2 + $0x10] sm:$0xff] %vm207, 0.0
          %211 = vst.msk [vmem:[#allocation2 + $0x18] sm:$0xff] %vm207, 0.0
        $region36: #{tpu_custom_call.1} parent=31 // pred_fallthru
          _
        %v212 = vld [vmem:[%s200] sm:$0xff]
        %v213 = vld [vmem:[%s200 + $0x8] sm:$0xff]
        %v214 = vld [vmem:[%s200 + $0x10] sm:$0xff]
        %v215 = vld [vmem:[%s200 + $0x18] sm:$0xff]
        %v216 = vld [vmem:[%s200 + $0x20] sm:$0xff]
        %v217 = vld [vmem:[%s200 + $0x28] sm:$0xff]
        %v218 = vld [vmem:[%s200 + $0x30] sm:$0xff]
        %v219 = vld [vmem:[%s200 + $0x38] sm:$0xff]
        %v220 = vld [vmem:[%s200 + $0x40] sm:$0xff]
        %v221 = vld [vmem:[%s200 + $0x48] sm:$0xff]
        %v222 = vld [vmem:[%s200 + $0x50] sm:$0xff]
        %v223 = vld [vmem:[%s200 + $0x58] sm:$0xff]
        %v224 = vld [vmem:[%s200 + $0x60] sm:$0xff]
        %v225 = vld [vmem:[%s200 + $0x68] sm:$0xff]
        %v226 = vld [vmem:[%s200 + $0x70] sm:$0xff]
        %v227 = vld [vmem:[%s200 + $0x78] sm:$0xff]
        %v228 = vld [vmem:[%s200 + $0x80] sm:$0xff]
        %v229 = vld [vmem:[%s200 + $0x88] sm:$0xff]
        %v230 = vld [vmem:[%s200 + $0x90] sm:$0xff]
        %v231 = vld [vmem:[%s200 + $0x98] sm:$0xff]
        %v232 = vld [vmem:[%s200 + $0xa0] sm:$0xff]
        %v233 = vld [vmem:[%s200 + $0xa8] sm:$0xff]
        %v234 = vld [vmem:[%s200 + $0xb0] sm:$0xff]
        %v235 = vld [vmem:[%s200 + $0xb8] sm:$0xff]
        %v236 = vld [vmem:[%s200 + $0xc0] sm:$0xff]
        %v237 = vld [vmem:[%s200 + $0xc8] sm:$0xff]
        %v238 = vld [vmem:[%s200 + $0xd0] sm:$0xff]
        %v239 = vld [vmem:[%s200 + $0xd8] sm:$0xff]
        %v240 = vld [vmem:[%s200 + $0xe0] sm:$0xff]
        %v241 = vld [vmem:[%s200 + $0xe8] sm:$0xff]
        %v242 = vld [vmem:[%s200 + $0xf0] sm:$0xff]
        %v243 = vld [vmem:[%s200 + $0xf8] sm:$0xff]
        %v244 = vld [vmem:[%s200 + $0x100] sm:$0xff]
        %v245 = vld [vmem:[%s200 + $0x108] sm:$0xff]
        %v246 = vld [vmem:[%s200 + $0x110] sm:$0xff]
        %v247 = vld [vmem:[%s200 + $0x118] sm:$0xff]
        %v248 = vld [vmem:[%s200 + $0x120] sm:$0xff]
        %v249 = vld [vmem:[%s200 + $0x128] sm:$0xff]
        %v250 = vld [vmem:[%s200 + $0x130] sm:$0xff]
        %v251 = vld [vmem:[%s200 + $0x138] sm:$0xff]
        %v252 = vld [vmem:[%s200 + $0x140] sm:$0xff]
        %v253 = vld [vmem:[%s200 + $0x148] sm:$0xff]
        %v254 = vld [vmem:[%s200 + $0x150] sm:$0xff]
        %v255 = vld [vmem:[%s200 + $0x158] sm:$0xff]
        %v256 = vld [vmem:[%s200 + $0x160] sm:$0xff]
        %v257 = vld [vmem:[%s200 + $0x168] sm:$0xff]
        %v258 = vld [vmem:[%s200 + $0x170] sm:$0xff]
        %v259 = vld [vmem:[%s200 + $0x178] sm:$0xff]
        %v260 = vld [vmem:[%s200 + $0x180] sm:$0xff]
        %v261 = vld [vmem:[%s200 + $0x188] sm:$0xff]
        %v262 = vld [vmem:[%s200 + $0x190] sm:$0xff]
        %v263 = vld [vmem:[%s200 + $0x198] sm:$0xff]
        %v264 = vld [vmem:[%s200 + $0x1a0] sm:$0xff]
        %v265 = vld [vmem:[%s200 + $0x1a8] sm:$0xff]
        %v266 = vld [vmem:[%s200 + $0x1b0] sm:$0xff]
        %v267 = vld [vmem:[%s200 + $0x1b8] sm:$0xff]
        %v268 = vld [vmem:[%s200 + $0x1c0] sm:$0xff]
        %v269 = vld [vmem:[%s200 + $0x1c8] sm:$0xff]
        %v270 = vld [vmem:[%s200 + $0x1d0] sm:$0xff]
        %v271 = vld [vmem:[%s200 + $0x1d8] sm:$0xff]
        %v272 = vld [vmem:[%s200 + $0x1e0] sm:$0xff]
        %v273 = vld [vmem:[%s200 + $0x1e8] sm:$0xff]
        %v274 = vld [vmem:[%s200 + $0x1f0] sm:$0xff]
        %v275 = vld [vmem:[%s200 + $0x1f8] sm:$0xff]
        %v276 = vld [vmem:[%s1] sm:$0xf]
        %v277 = vld [vmem:[%s1 + $0x4] sm:$0xf]
        %v278 = vld [vmem:[%s1 + $0x8] sm:$0xf]
        %v279 = vld [vmem:[%s1 + $0xc] sm:$0xf]
        %v280 = vld [vmem:[%s1 + $0x10] sm:$0xf]
        %v281 = vld [vmem:[%s1 + $0x14] sm:$0xf]
        %v282 = vld [vmem:[%s1 + $0x18] sm:$0xf]
        %v283 = vld [vmem:[%s1 + $0x1c] sm:$0xf]
        %v284 = vld [vmem:[%s1 + $0x20] sm:$0xf]
        %v285 = vld [vmem:[%s1 + $0x24] sm:$0xf]
        %v286 = vld [vmem:[%s1 + $0x28] sm:$0xf]
        %v287 = vld [vmem:[%s1 + $0x2c] sm:$0xf]
        %v288 = vld [vmem:[%s1 + $0x30] sm:$0xf]
        %v289 = vld [vmem:[%s1 + $0x34] sm:$0xf]
        %v290 = vld [vmem:[%s1 + $0x38] sm:$0xf]
        %v291 = vld [vmem:[%s1 + $0x3c] sm:$0xf]
        %v292 = vld [vmem:[%s1 + $0x40] sm:$0xf]
        %v293 = vld [vmem:[%s1 + $0x44] sm:$0xf]
        %v294 = vld [vmem:[%s1 + $0x48] sm:$0x3]
        %v295 = vld [vmem:[%s2] sm:$0x1]
        %v297 = vlaneseq
        %v298 = vshrl.u32 %v297, 7
        %v299 = vsub.s32 0, %v298
        %v300 = vrot.slane %v295, %v299
        %v366 = vunpack.c.l.b16 %v212
        %v367 = vunpack.c.h.b16 %v212
        %v368 = vunpack.c.l.b16 %v213
        %v369 = vunpack.c.h.b16 %v213
        %v370 = vunpack.c.l.b16 %v214
        %v371 = vunpack.c.h.b16 %v214
        %v372 = vunpack.c.l.b16 %v215
        %v373 = vunpack.c.h.b16 %v215
        %v374 = vunpack.c.l.b16 %v216
        %v375 = vunpack.c.h.b16 %v216
        %v376 = vunpack.c.l.b16 %v217
        %v377 = vunpack.c.h.b16 %v217
        %v378 = vunpack.c.l.b16 %v218
        %v379 = vunpack.c.h.b16 %v218
        %v380 = vunpack.c.l.b16 %v219
        %v381 = vunpack.c.h.b16 %v219
        %v382 = vunpack.c.l.b16 %v220
        %v383 = vunpack.c.h.b16 %v220
        %v384 = vunpack.c.l.b16 %v221
        %v385 = vunpack.c.h.b16 %v221
        %v386 = vunpack.c.l.b16 %v222
        %v387 = vunpack.c.h.b16 %v222
        %v388 = vunpack.c.l.b16 %v223
        %v389 = vunpack.c.h.b16 %v223
        %v390 = vunpack.c.l.b16 %v224
        %v391 = vunpack.c.h.b16 %v224
        %v392 = vunpack.c.l.b16 %v225
        %v393 = vunpack.c.h.b16 %v225
        %v394 = vunpack.c.l.b16 %v226
        %v395 = vunpack.c.h.b16 %v226
        %v396 = vunpack.c.l.b16 %v227
        %v397 = vunpack.c.h.b16 %v227
        %v398 = vunpack.c.l.b16 %v228
        %v399 = vunpack.c.h.b16 %v228
        %v400 = vunpack.c.l.b16 %v229
        %v401 = vunpack.c.h.b16 %v229
        %v402 = vunpack.c.l.b16 %v230
        %v403 = vunpack.c.h.b16 %v230
        %v404 = vunpack.c.l.b16 %v231
        %v405 = vunpack.c.h.b16 %v231
        %v406 = vunpack.c.l.b16 %v232
        %v407 = vunpack.c.h.b16 %v232
        %v408 = vunpack.c.l.b16 %v233
        %v409 = vunpack.c.h.b16 %v233
        %v410 = vunpack.c.l.b16 %v234
        %v411 = vunpack.c.h.b16 %v234
        %v412 = vunpack.c.l.b16 %v235
        %v413 = vunpack.c.h.b16 %v235
        %v414 = vunpack.c.l.b16 %v236
        %v415 = vunpack.c.h.b16 %v236
        %v416 = vunpack.c.l.b16 %v237
        %v417 = vunpack.c.h.b16 %v237
        %v418 = vunpack.c.l.b16 %v238
        %v419 = vunpack.c.h.b16 %v238
        %v420 = vunpack.c.l.b16 %v239
        %v421 = vunpack.c.h.b16 %v239
        %v422 = vunpack.c.l.b16 %v240
        %v423 = vunpack.c.h.b16 %v240
        %v424 = vunpack.c.l.b16 %v241
        %v425 = vunpack.c.h.b16 %v241
        %v426 = vunpack.c.l.b16 %v242
        %v427 = vunpack.c.h.b16 %v242
        %v428 = vunpack.c.l.b16 %v243
        %v429 = vunpack.c.h.b16 %v243
        %v430 = vunpack.c.l.b16 %v244
        %v431 = vunpack.c.h.b16 %v244
        %v432 = vunpack.c.l.b16 %v245
        %v433 = vunpack.c.h.b16 %v245
        %v434 = vunpack.c.l.b16 %v246
        %v435 = vunpack.c.h.b16 %v246
        %v436 = vunpack.c.l.b16 %v247
        %v437 = vunpack.c.h.b16 %v247
        %v438 = vunpack.c.l.b16 %v248
        %v439 = vunpack.c.h.b16 %v248
        %v440 = vunpack.c.l.b16 %v249
        %v441 = vunpack.c.h.b16 %v249
        %v442 = vunpack.c.l.b16 %v250
        %v443 = vunpack.c.h.b16 %v250
        %v444 = vunpack.c.l.b16 %v251
        %v445 = vunpack.c.h.b16 %v251
        %v446 = vunpack.c.l.b16 %v252
        %v447 = vunpack.c.h.b16 %v252
        %v448 = vunpack.c.l.b16 %v253
        %v449 = vunpack.c.h.b16 %v253
        %v450 = vunpack.c.l.b16 %v254
        %v451 = vunpack.c.h.b16 %v254
        %v452 = vunpack.c.l.b16 %v255
        %v453 = vunpack.c.h.b16 %v255
        %v454 = vunpack.c.l.b16 %v256
        %v455 = vunpack.c.h.b16 %v256
        %v456 = vunpack.c.l.b16 %v257
        %v457 = vunpack.c.h.b16 %v257
        %v458 = vunpack.c.l.b16 %v258
        %v459 = vunpack.c.h.b16 %v258
        %v460 = vunpack.c.l.b16 %v259
        %v461 = vunpack.c.h.b16 %v259
        %v462 = vunpack.c.l.b16 %v260
        %v463 = vunpack.c.h.b16 %v260
        %v464 = vunpack.c.l.b16 %v261
        %v465 = vunpack.c.h.b16 %v261
        %v466 = vunpack.c.l.b16 %v262
        %v467 = vunpack.c.h.b16 %v262
        %v468 = vunpack.c.l.b16 %v263
        %v469 = vunpack.c.h.b16 %v263
        %v470 = vunpack.c.l.b16 %v264
        %v471 = vunpack.c.h.b16 %v264
        %v472 = vunpack.c.l.b16 %v265
        %v473 = vunpack.c.h.b16 %v265
        %v474 = vunpack.c.l.b16 %v266
        %v475 = vunpack.c.h.b16 %v266
        %v476 = vunpack.c.l.b16 %v267
        %v477 = vunpack.c.h.b16 %v267
        %v478 = vunpack.c.l.b16 %v268
        %v479 = vunpack.c.h.b16 %v268
        %v480 = vunpack.c.l.b16 %v269
        %v481 = vunpack.c.h.b16 %v269
        %v482 = vunpack.c.l.b16 %v270
        %v483 = vunpack.c.h.b16 %v270
        %v484 = vunpack.c.l.b16 %v271
        %v485 = vunpack.c.h.b16 %v271
        %v486 = vunpack.c.l.b16 %v272
        %v487 = vunpack.c.h.b16 %v272
        %v488 = vunpack.c.l.b16 %v273
        %v489 = vunpack.c.h.b16 %v273
        %v490 = vunpack.c.l.b16 %v274
        %v491 = vunpack.c.h.b16 %v274
        %v492 = vunpack.c.l.b16 %v275
        %v493 = vunpack.c.h.b16 %v275
        %v494 = vpack.c.b16 %v368, %v366
        %v495 = vpack.c.b16 %v369, %v367
        %v496 = vpack.c.b16 %v372, %v370
        %v497 = vpack.c.b16 %v373, %v371
        %v498 = vpack.c.b16 %v376, %v374
        %v499 = vpack.c.b16 %v377, %v375
        %v500 = vpack.c.b16 %v380, %v378
        %v501 = vpack.c.b16 %v381, %v379
        %v502 = vpack.c.b16 %v384, %v382
        %v503 = vpack.c.b16 %v385, %v383
        %v504 = vpack.c.b16 %v388, %v386
        %v505 = vpack.c.b16 %v389, %v387
        %v506 = vpack.c.b16 %v392, %v390
        %v507 = vpack.c.b16 %v393, %v391
        %v508 = vpack.c.b16 %v396, %v394
        %v509 = vpack.c.b16 %v397, %v395
        %v510 = vpack.c.b16 %v400, %v398
        %v511 = vpack.c.b16 %v401, %v399
        %v512 = vpack.c.b16 %v404, %v402
        %v513 = vpack.c.b16 %v405, %v403
        %v514 = vpack.c.b16 %v408, %v406
        %v515 = vpack.c.b16 %v409, %v407
        %v516 = vpack.c.b16 %v412, %v410
        %v517 = vpack.c.b16 %v413, %v411
        %v518 = vpack.c.b16 %v416, %v414
        %v519 = vpack.c.b16 %v417, %v415
        %v520 = vpack.c.b16 %v420, %v418
        %v521 = vpack.c.b16 %v421, %v419
        %v522 = vpack.c.b16 %v424, %v422
        %v523 = vpack.c.b16 %v425, %v423
        %v524 = vpack.c.b16 %v428, %v426
        %v525 = vpack.c.b16 %v429, %v427
        %v526 = vpack.c.b16 %v432, %v430
        %v527 = vpack.c.b16 %v433, %v431
        %v528 = vpack.c.b16 %v436, %v434
        %v529 = vpack.c.b16 %v437, %v435
        %v530 = vpack.c.b16 %v440, %v438
        %v531 = vpack.c.b16 %v441, %v439
        %v532 = vpack.c.b16 %v444, %v442
        %v533 = vpack.c.b16 %v445, %v443
        %v534 = vpack.c.b16 %v448, %v446
        %v535 = vpack.c.b16 %v449, %v447
        %v536 = vpack.c.b16 %v452, %v450
        %v537 = vpack.c.b16 %v453, %v451
        %v538 = vpack.c.b16 %v456, %v454
        %v539 = vpack.c.b16 %v457, %v455
        %v540 = vpack.c.b16 %v460, %v458
        %v541 = vpack.c.b16 %v461, %v459
        %v542 = vpack.c.b16 %v464, %v462
        %v543 = vpack.c.b16 %v465, %v463
        %v544 = vpack.c.b16 %v468, %v466
        %v545 = vpack.c.b16 %v469, %v467
        %v546 = vpack.c.b16 %v472, %v470
        %v547 = vpack.c.b16 %v473, %v471
        %v548 = vpack.c.b16 %v476, %v474
        %v549 = vpack.c.b16 %v477, %v475
        %v550 = vpack.c.b16 %v480, %v478
        %v551 = vpack.c.b16 %v481, %v479
        %v552 = vpack.c.b16 %v484, %v482
        %v553 = vpack.c.b16 %v485, %v483
        %v554 = vpack.c.b16 %v488, %v486
        %v555 = vpack.c.b16 %v489, %v487
        %v556 = vpack.c.b16 %v492, %v490
        %v557 = vpack.c.b16 %v493, %v491
        %v609 = vunpack.c.l.b16 %v276
        %v610 = vunpack.c.l.b16 %v277
        %v611 = vunpack.c.l.b16 %v278
        %v612 = vunpack.c.l.b16 %v279
        %v613 = vunpack.c.l.b16 %v280
        %v614 = vunpack.c.l.b16 %v281
        %v615 = vunpack.c.l.b16 %v282
        %v616 = vunpack.c.l.b16 %v283
        %v617 = vunpack.c.l.b16 %v284
        %v618 = vunpack.c.l.b16 %v285
        %v619 = vunpack.c.l.b16 %v286
        %v620 = vunpack.c.l.b16 %v287
        %v621 = vunpack.c.l.b16 %v288
        %v622 = vunpack.c.l.b16 %v289
        %v623 = vunpack.c.l.b16 %v290
        %v624 = vunpack.c.l.b16 %v291
        %v625 = vunpack.c.l.b16 %v292
        %v626 = vunpack.c.l.b16 %v293
        %v627 = vunpack.c.l.b16 %v294
        %v628 = vpack.c.b16 %v610, %v609
        %v629 = vpack.c.b16 %v612, %v611
        %v630 = vpack.c.b16 %v614, %v613
        %v631 = vpack.c.b16 %v616, %v615
        %v632 = vpack.c.b16 %v618, %v617
        %v633 = vpack.c.b16 %v620, %v619
        %v634 = vpack.c.b16 %v622, %v621
        %v635 = vpack.c.b16 %v624, %v623
        %v636 = vpack.c.b16 %v626, %v625
        %v637 = vpack.c.b16 %v627, %v627
        %vm647 = vcmask 154624
        %v649 = vsel %vm647, %v495, 0
        %v652 = vsel %vm647, %v497, 0
        %v655 = vsel %vm647, %v499, 0
        %v658 = vsel %vm647, %v501, 0
        %v661 = vsel %vm647, %v503, 0
        %v664 = vsel %vm647, %v505, 0
        %v667 = vsel %vm647, %v507, 0
        %v670 = vsel %vm647, %v509, 0
        %v673 = vsel %vm647, %v511, 0
        %v676 = vsel %vm647, %v513, 0
        %v679 = vsel %vm647, %v515, 0
        %v682 = vsel %vm647, %v517, 0
        %v685 = vsel %vm647, %v519, 0
        %v688 = vsel %vm647, %v521, 0
        %v691 = vsel %vm647, %v523, 0
        %v694 = vsel %vm647, %v525, 0
        %v697 = vsel %vm647, %v527, 0
        %v700 = vsel %vm647, %v529, 0
        %v703 = vsel %vm647, %v531, 0
        %v706 = vsel %vm647, %v533, 0
        %v709 = vsel %vm647, %v535, 0
        %v712 = vsel %vm647, %v537, 0
        %v715 = vsel %vm647, %v539, 0
        %v718 = vsel %vm647, %v541, 0
        %v721 = vsel %vm647, %v543, 0
        %v724 = vsel %vm647, %v545, 0
        %v727 = vsel %vm647, %v547, 0
        %v730 = vsel %vm647, %v549, 0
        %v733 = vsel %vm647, %v551, 0
        %v736 = vsel %vm647, %v553, 0
        %v739 = vsel %vm647, %v555, 0
        %v742 = vsel %vm647, %v557, 0
        %vm744 = vcmask 1040384
        %vm745 = vcmask 1041408
        %v746 = vsel %vm744, 4294967295, 65535
        %v747 = vsel %vm745, %v746, 0
        %v749 = vand.u32 %v637, %v747
        %751 = vmatprep.subr.bf16.mxu0 0
        %752 = vmatpush1.bf16.msra.mxu0 %v635
        %753 = vmatprep.subr.bf16.mxu0 0
        %754 = vmatpush1.bf16.msra.mxu0 %v634
        %755 = vmatprep.subr.bf16.mxu0 0
        %756 = vmatpush1.bf16.msra.mxu0 %v633
        %757 = vmatprep.subr.bf16.mxu0 0
        %758 = vmatpush1.bf16.msra.mxu0 %v632
        %759 = vmatprep.subr.bf16.mxu0 0
        %760 = vmatpush1.bf16.msra.mxu0 %v631
        %761 = vmatprep.subr.bf16.mxu0 0
        %762 = vmatpush1.bf16.msra.mxu0 %v630
        %763 = vmatprep.subr.bf16.mxu0 0
        %764 = vmatpush1.bf16.msra.mxu0 %v629
        %765 = vmatprep.subr.bf16.mxu0 0
        %766 = vmatpush1.bf16.msra.mxu0 %v628
        %767 = vmatprep.subr.bf16.mxu0 0
        %768 = vmatpush2.bf16.msra.mxu0 0
        %769 = vmatprep.subr.bf16.mxu0 0
        %770 = vmatpush2.bf16.msra.mxu0 0
        %771 = vmatprep.subr.bf16.mxu0 0
        %772 = vmatpush2.bf16.msra.mxu0 0
        %773 = vmatprep.subr.bf16.mxu0 0
        %774 = vmatpush2.bf16.msra.mxu0 0
        %775 = vmatprep.subr.bf16.mxu0 0
        %776 = vmatpush2.bf16.msra.mxu0 0
        %777 = vmatprep.subr.bf16.mxu0 0
        %778 = vmatpush2.bf16.msra.mxu0 0
        %779 = vmatprep.subr.bf16.mxu0 0
        %780 = vmatpush2.bf16.msra.mxu0 %v749
        %781 = vmatprep.subr.bf16.mxu0 0
        %782 = vmatpush2.bf16.msra.mxu0 %v636
        %783 = vmatprep.mubr.bf16.mxu0 %v649
        %784 = vmatmul.mubr.bf16.gmra.mxu0 %v494
        %v785 = vpop.f32.mrf.mxu0
        %v786 = vadd.f32 %v300, %v785
        %v787 = vpop.f32.mrf.mxu0
        %v788 = vpop.f32.mrf.mxu0
        %v789 = vadd.f32 %v300, %v788
        %v790 = vpop.f32.mrf.mxu0
        %791 = vmatprep.mubr.bf16.mxu0 %v652
        %792 = vmatmul.mubr.bf16.gmra.mxu0 %v496
        %v793 = vpop.f32.mrf.mxu0
        %v794 = vadd.f32 %v300, %v793
        %v795 = vpop.f32.mrf.mxu0
        %v796 = vpop.f32.mrf.mxu0
        %v797 = vadd.f32 %v300, %v796
        %v798 = vpop.f32.mrf.mxu0
        %799 = vmatprep.mubr.bf16.mxu0 %v655
        %800 = vmatmul.mubr.bf16.gmra.mxu0 %v498
        %v801 = vpop.f32.mrf.mxu0
        %v802 = vadd.f32 %v300, %v801
        %v803 = vpop.f32.mrf.mxu0
        %v804 = vpop.f32.mrf.mxu0
        %v805 = vadd.f32 %v300, %v804
        %v806 = vpop.f32.mrf.mxu0
        %807 = vmatprep.mubr.bf16.mxu0 %v658
        %808 = vmatmul.mubr.bf16.gmra.mxu0 %v500
        %v809 = vpop.f32.mrf.mxu0
        %v810 = vadd.f32 %v300, %v809
        %v811 = vpop.f32.mrf.mxu0
        %v812 = vpop.f32.mrf.mxu0
        %v813 = vadd.f32 %v300, %v812
        %v814 = vpop.f32.mrf.mxu0
        %815 = vmatprep.mubr.bf16.mxu0 %v661
        %816 = vmatmul.mubr.bf16.gmra.mxu0 %v502
        %v817 = vpop.f32.mrf.mxu0
        %v818 = vadd.f32 %v300, %v817
        %v819 = vpop.f32.mrf.mxu0
        %v820 = vpop.f32.mrf.mxu0
        %v821 = vadd.f32 %v300, %v820
        %v822 = vpop.f32.mrf.mxu0
        %823 = vmatprep.mubr.bf16.mxu0 %v664
        %824 = vmatmul.mubr.bf16.gmra.mxu0 %v504
        %v825 = vpop.f32.mrf.mxu0
        %v826 = vadd.f32 %v300, %v825
        %v827 = vpop.f32.mrf.mxu0
        %v828 = vpop.f32.mrf.mxu0
        %v829 = vadd.f32 %v300, %v828
        %v830 = vpop.f32.mrf.mxu0
        %831 = vmatprep.mubr.bf16.mxu0 %v667
        %832 = vmatmul.mubr.bf16.gmra.mxu0 %v506
        %v833 = vpop.f32.mrf.mxu0
        %v834 = vadd.f32 %v300, %v833
        %v835 = vpop.f32.mrf.mxu0
        %v836 = vpop.f32.mrf.mxu0
        %v837 = vadd.f32 %v300, %v836
        %v838 = vpop.f32.mrf.mxu0
        %839 = vmatprep.mubr.bf16.mxu0 %v670
        %840 = vmatmul.mubr.bf16.gmra.mxu0 %v508
        %v841 = vpop.f32.mrf.mxu0
        %v842 = vadd.f32 %v300, %v841
        %v843 = vpop.f32.mrf.mxu0
        %v844 = vpop.f32.mrf.mxu0
        %v845 = vadd.f32 %v300, %v844
        %v846 = vpop.f32.mrf.mxu0
        %847 = vmatprep.mubr.bf16.mxu0 %v673
        %848 = vmatmul.mubr.bf16.gmra.mxu0 %v510
        %v849 = vpop.f32.mrf.mxu0
        %v850 = vadd.f32 %v300, %v849
        %v851 = vpop.f32.mrf.mxu0
        %v852 = vpop.f32.mrf.mxu0
        %v853 = vadd.f32 %v300, %v852
        %v854 = vpop.f32.mrf.mxu0
        %855 = vmatprep.mubr.bf16.mxu0 %v676
        %856 = vmatmul.mubr.bf16.gmra.mxu0 %v512
        %v857 = vpop.f32.mrf.mxu0
        %v858 = vadd.f32 %v300, %v857
        %v859 = vpop.f32.mrf.mxu0
        %v860 = vpop.f32.mrf.mxu0
        %v861 = vadd.f32 %v300, %v860
        %v862 = vpop.f32.mrf.mxu0
        %863 = vmatprep.mubr.bf16.mxu0 %v679
        %864 = vmatmul.mubr.bf16.gmra.mxu0 %v514
        %v865 = vpop.f32.mrf.mxu0
        %v866 = vadd.f32 %v300, %v865
        %v867 = vpop.f32.mrf.mxu0
        %v868 = vpop.f32.mrf.mxu0
        %v869 = vadd.f32 %v300, %v868
        %v870 = vpop.f32.mrf.mxu0
        %871 = vmatprep.mubr.bf16.mxu0 %v682
        %872 = vmatmul.mubr.bf16.gmra.mxu0 %v516
        %v873 = vpop.f32.mrf.mxu0
        %v874 = vadd.f32 %v300, %v873
        %v875 = vpop.f32.mrf.mxu0
        %v876 = vpop.f32.mrf.mxu0
        %v877 = vadd.f32 %v300, %v876
        %v878 = vpop.f32.mrf.mxu0
        %879 = vmatprep.mubr.bf16.mxu0 %v685
        %880 = vmatmul.mubr.bf16.gmra.mxu0 %v518
        %v881 = vpop.f32.mrf.mxu0
        %v882 = vadd.f32 %v300, %v881
        %v883 = vpop.f32.mrf.mxu0
        %v884 = vpop.f32.mrf.mxu0
        %v885 = vadd.f32 %v300, %v884
        %v886 = vpop.f32.mrf.mxu0
        %887 = vmatprep.mubr.bf16.mxu0 %v688
        %888 = vmatmul.mubr.bf16.gmra.mxu0 %v520
        %v889 = vpop.f32.mrf.mxu0
        %v890 = vadd.f32 %v300, %v889
        %v891 = vpop.f32.mrf.mxu0
        %v892 = vpop.f32.mrf.mxu0
        %v893 = vadd.f32 %v300, %v892
        %v894 = vpop.f32.mrf.mxu0
        %895 = vmatprep.mubr.bf16.mxu0 %v691
        %896 = vmatmul.mubr.bf16.gmra.mxu0 %v522
        %v897 = vpop.f32.mrf.mxu0
        %v898 = vadd.f32 %v300, %v897
        %v899 = vpop.f32.mrf.mxu0
        %v900 = vpop.f32.mrf.mxu0
        %v901 = vadd.f32 %v300, %v900
        %v902 = vpop.f32.mrf.mxu0
        %903 = vmatprep.mubr.bf16.mxu0 %v694
        %904 = vmatmul.mubr.bf16.gmra.mxu0 %v524
        %v905 = vpop.f32.mrf.mxu0
        %v906 = vadd.f32 %v300, %v905
        %v907 = vpop.f32.mrf.mxu0
        %v908 = vpop.f32.mrf.mxu0
        %v909 = vadd.f32 %v300, %v908
        %v910 = vpop.f32.mrf.mxu0
        %911 = vmatprep.mubr.bf16.mxu0 %v697
        %912 = vmatmul.mubr.bf16.gmra.mxu0 %v526
        %v913 = vpop.f32.mrf.mxu0
        %v914 = vadd.f32 %v300, %v913
        %v915 = vpop.f32.mrf.mxu0
        %v916 = vpop.f32.mrf.mxu0
        %v917 = vadd.f32 %v300, %v916
        %v918 = vpop.f32.mrf.mxu0
        %919 = vmatprep.mubr.bf16.mxu0 %v700
        %920 = vmatmul.mubr.bf16.gmra.mxu0 %v528
        %v921 = vpop.f32.mrf.mxu0
        %v922 = vadd.f32 %v300, %v921
        %v923 = vpop.f32.mrf.mxu0
        %v924 = vpop.f32.mrf.mxu0
        %v925 = vadd.f32 %v300, %v924
        %v926 = vpop.f32.mrf.mxu0
        %927 = vmatprep.mubr.bf16.mxu0 %v703
        %928 = vmatmul.mubr.bf16.gmra.mxu0 %v530
        %v929 = vpop.f32.mrf.mxu0
        %v930 = vadd.f32 %v300, %v929
        %v931 = vpop.f32.mrf.mxu0
        %v932 = vpop.f32.mrf.mxu0
        %v933 = vadd.f32 %v300, %v932
        %v934 = vpop.f32.mrf.mxu0
        %935 = vmatprep.mubr.bf16.mxu0 %v706
        %936 = vmatmul.mubr.bf16.gmra.mxu0 %v532
        %v937 = vpop.f32.mrf.mxu0
        %v938 = vadd.f32 %v300, %v937
        %v939 = vpop.f32.mrf.mxu0
        %v940 = vpop.f32.mrf.mxu0
        %v941 = vadd.f32 %v300, %v940
        %v942 = vpop.f32.mrf.mxu0
        %943 = vmatprep.mubr.bf16.mxu0 %v709
        %944 = vmatmul.mubr.bf16.gmra.mxu0 %v534
        %v945 = vpop.f32.mrf.mxu0
        %v946 = vadd.f32 %v300, %v945
        %v947 = vpop.f32.mrf.mxu0
        %v948 = vpop.f32.mrf.mxu0
        %v949 = vadd.f32 %v300, %v948
        %v950 = vpop.f32.mrf.mxu0
        %951 = vmatprep.mubr.bf16.mxu0 %v712
        %952 = vmatmul.mubr.bf16.gmra.mxu0 %v536
        %v953 = vpop.f32.mrf.mxu0
        %v954 = vadd.f32 %v300, %v953
        %v955 = vpop.f32.mrf.mxu0
        %v956 = vpop.f32.mrf.mxu0
        %v957 = vadd.f32 %v300, %v956
        %v958 = vpop.f32.mrf.mxu0
        %959 = vmatprep.mubr.bf16.mxu0 %v715
        %960 = vmatmul.mubr.bf16.gmra.mxu0 %v538
        %v961 = vpop.f32.mrf.mxu0
        %v962 = vadd.f32 %v300, %v961
        %v963 = vpop.f32.mrf.mxu0
        %v964 = vpop.f32.mrf.mxu0
        %v965 = vadd.f32 %v300, %v964
        %v966 = vpop.f32.mrf.mxu0
        %967 = vmatprep.mubr.bf16.mxu0 %v718
        %968 = vmatmul.mubr.bf16.gmra.mxu0 %v540
        %v969 = vpop.f32.mrf.mxu0
        %v970 = vadd.f32 %v300, %v969
        %v971 = vpop.f32.mrf.mxu0
        %v972 = vpop.f32.mrf.mxu0
        %v973 = vadd.f32 %v300, %v972
        %v974 = vpop.f32.mrf.mxu0
        %975 = vmatprep.mubr.bf16.mxu0 %v721
        %976 = vmatmul.mubr.bf16.gmra.mxu0 %v542
        %v977 = vpop.f32.mrf.mxu0
        %v978 = vadd.f32 %v300, %v977
        %v979 = vpop.f32.mrf.mxu0
        %v980 = vpop.f32.mrf.mxu0
        %v981 = vadd.f32 %v300, %v980
        %v982 = vpop.f32.mrf.mxu0
        %983 = vmatprep.mubr.bf16.mxu0 %v724
        %984 = vmatmul.mubr.bf16.gmra.mxu0 %v544
        %v985 = vpop.f32.mrf.mxu0
        %v986 = vadd.f32 %v300, %v985
        %v987 = vpop.f32.mrf.mxu0
        %v988 = vpop.f32.mrf.mxu0
        %v989 = vadd.f32 %v300, %v988
        %v990 = vpop.f32.mrf.mxu0
        %991 = vmatprep.mubr.bf16.mxu0 %v727
        %992 = vmatmul.mubr.bf16.gmra.mxu0 %v546
        %v993 = vpop.f32.mrf.mxu0
        %v994 = vadd.f32 %v300, %v993
        %v995 = vpop.f32.mrf.mxu0
        %v996 = vpop.f32.mrf.mxu0
        %v997 = vadd.f32 %v300, %v996
        %v998 = vpop.f32.mrf.mxu0
        %999 = vmatprep.mubr.bf16.mxu0 %v730
        %1000 = vmatmul.mubr.bf16.gmra.mxu0 %v548
        %v1001 = vpop.f32.mrf.mxu0
        %v1002 = vadd.f32 %v300, %v1001
        %v1003 = vpop.f32.mrf.mxu0
        %v1004 = vpop.f32.mrf.mxu0
        %v1005 = vadd.f32 %v300, %v1004
        %v1006 = vpop.f32.mrf.mxu0
        %1007 = vmatprep.mubr.bf16.mxu0 %v733
        %1008 = vmatmul.mubr.bf16.gmra.mxu0 %v550
        %v1009 = vpop.f32.mrf.mxu0
        %v1010 = vadd.f32 %v300, %v1009
        %v1011 = vpop.f32.mrf.mxu0
        %v1012 = vpop.f32.mrf.mxu0
        %v1013 = vadd.f32 %v300, %v1012
        %v1014 = vpop.f32.mrf.mxu0
        %1015 = vmatprep.mubr.bf16.mxu0 %v736
        %1016 = vmatmul.mubr.bf16.gmra.mxu0 %v552
        %v1017 = vpop.f32.mrf.mxu0
        %v1018 = vadd.f32 %v300, %v1017
        %v1019 = vpop.f32.mrf.mxu0
        %v1020 = vpop.f32.mrf.mxu0
        %v1021 = vadd.f32 %v300, %v1020
        %v1022 = vpop.f32.mrf.mxu0
        %1023 = vmatprep.mubr.bf16.mxu0 %v739
        %1024 = vmatmul.mubr.bf16.gmra.mxu0 %v554
        %v1025 = vpop.f32.mrf.mxu0
        %v1026 = vadd.f32 %v300, %v1025
        %v1027 = vpop.f32.mrf.mxu0
        %v1028 = vpop.f32.mrf.mxu0
        %v1029 = vadd.f32 %v300, %v1028
        %v1030 = vpop.f32.mrf.mxu0
        %1031 = vmatprep.mubr.bf16.mxu0 %v742
        %1032 = vmatmul.mubr.bf16.gmra.mxu0 %v556
        %v1033 = vpop.f32.mrf.mxu0
        %v1034 = vadd.f32 %v300, %v1033
        %v1035 = vpop.f32.mrf.mxu0
        %v1036 = vpop.f32.mrf.mxu0
        %v1037 = vadd.f32 %v300, %v1036
        %v1038 = vpop.f32.mrf.mxu0
        %1039 = vdwg.mxu0
        %v1040 = vmax.f32 %v786, 0.0
        %v1041 = vmax.f32 %v789, 0.0
        %v1042 = vmax.f32 %v794, 0.0
        %v1043 = vmax.f32 %v797, 0.0
        %v1044 = vmax.f32 %v802, 0.0
        %v1045 = vmax.f32 %v805, 0.0
        %v1046 = vmax.f32 %v810, 0.0
        %v1047 = vmax.f32 %v813, 0.0
        %v1048 = vmax.f32 %v818, 0.0
        %v1049 = vmax.f32 %v821, 0.0
        %v1050 = vmax.f32 %v826, 0.0
        %v1051 = vmax.f32 %v829, 0.0
        %v1052 = vmax.f32 %v834, 0.0
        %v1053 = vmax.f32 %v837, 0.0
        %v1054 = vmax.f32 %v842, 0.0
        %v1055 = vmax.f32 %v845, 0.0
        %v1056 = vmax.f32 %v850, 0.0
        %v1057 = vmax.f32 %v853, 0.0
        %v1058 = vmax.f32 %v858, 0.0
        %v1059 = vmax.f32 %v861, 0.0
        %v1060 = vmax.f32 %v866, 0.0
        %v1061 = vmax.f32 %v869, 0.0
        %v1062 = vmax.f32 %v874, 0.0
        %v1063 = vmax.f32 %v877, 0.0
        %v1064 = vmax.f32 %v882, 0.0
        %v1065 = vmax.f32 %v885, 0.0
        %v1066 = vmax.f32 %v890, 0.0
        %v1067 = vmax.f32 %v893, 0.0
        %v1068 = vmax.f32 %v898, 0.0
        %v1069 = vmax.f32 %v901, 0.0
        %v1070 = vmax.f32 %v906, 0.0
        %v1071 = vmax.f32 %v909, 0.0
        %v1072 = vmax.f32 %v914, 0.0
        %v1073 = vmax.f32 %v917, 0.0
        %v1074 = vmax.f32 %v922, 0.0
        %v1075 = vmax.f32 %v925, 0.0
        %v1076 = vmax.f32 %v930, 0.0
        %v1077 = vmax.f32 %v933, 0.0
        %v1078 = vmax.f32 %v938, 0.0
        %v1079 = vmax.f32 %v941, 0.0
        %v1080 = vmax.f32 %v946, 0.0
        %v1081 = vmax.f32 %v949, 0.0
        %v1082 = vmax.f32 %v954, 0.0
        %v1083 = vmax.f32 %v957, 0.0
        %v1084 = vmax.f32 %v962, 0.0
        %v1085 = vmax.f32 %v965, 0.0
        %v1086 = vmax.f32 %v970, 0.0
        %v1087 = vmax.f32 %v973, 0.0
        %v1088 = vmax.f32 %v978, 0.0
        %v1089 = vmax.f32 %v981, 0.0
        %v1090 = vmax.f32 %v986, 0.0
        %v1091 = vmax.f32 %v989, 0.0
        %v1092 = vmax.f32 %v994, 0.0
        %v1093 = vmax.f32 %v997, 0.0
        %v1094 = vmax.f32 %v1002, 0.0
        %v1095 = vmax.f32 %v1005, 0.0
        %v1096 = vmax.f32 %v1010, 0.0
        %v1097 = vmax.f32 %v1013, 0.0
        %v1098 = vmax.f32 %v1018, 0.0
        %v1099 = vmax.f32 %v1021, 0.0
        %v1100 = vmax.f32 %v1026, 0.0
        %v1101 = vmax.f32 %v1029, 0.0
        %v1102 = vmax.f32 %v1034, 0.0
        %v1103 = vmax.f32 %v1037, 0.0
        %v1104 = vld [vmem:[#allocation2] sm:$0xff]
        %v1105 = vld [vmem:[#allocation2 + $0x8] sm:$0xff]
        %v1106 = vld [vmem:[#allocation2 + $0x10] sm:$0xff]
        %v1107 = vld [vmem:[#allocation2 + $0x18] sm:$0xff]
        %vm1108 = vcmask 523264
        %1109 = vst.msk [vmem:[#allocation2] sm:$0xff] %vm1108, %v1100
        %1110 = vst.msk [vmem:[#allocation2 + $0x8] sm:$0xff] %vm1108, %v1101
        %1111 = vst.msk [vmem:[#allocation2 + $0x10] sm:$0xff] %vm1108, %v1102
        %1112 = vst.msk [vmem:[#allocation2 + $0x18] sm:$0xff] %vm1108, %v1103
        %v1113 = vmax.f32 %v1040, %v1044
        %v1114 = vmax.f32 %v1041, %v1045
        %v1115 = vmax.f32 %v1042, %v1046
        %v1116 = vmax.f32 %v1043, %v1047
        %v1117 = vmax.f32 %v1048, %v1052
        %v1118 = vmax.f32 %v1049, %v1053
        %v1119 = vmax.f32 %v1050, %v1054
        %v1120 = vmax.f32 %v1051, %v1055
        %v1121 = vmax.f32 %v1056, %v1060
        %v1122 = vmax.f32 %v1057, %v1061
        %v1123 = vmax.f32 %v1058, %v1062
        %v1124 = vmax.f32 %v1059, %v1063
        %v1125 = vmax.f32 %v1064, %v1068
        %v1126 = vmax.f32 %v1065, %v1069
        %v1127 = vmax.f32 %v1066, %v1070
        %v1128 = vmax.f32 %v1067, %v1071
        %v1129 = vmax.f32 %v1072, %v1076
        %v1130 = vmax.f32 %v1073, %v1077
        %v1131 = vmax.f32 %v1074, %v1078
        %v1132 = vmax.f32 %v1075, %v1079
        %v1133 = vmax.f32 %v1080, %v1084
        %v1134 = vmax.f32 %v1081, %v1085
        %v1135 = vmax.f32 %v1082, %v1086
        %v1136 = vmax.f32 %v1083, %v1087
        %v1137 = vmax.f32 %v1088, %v1092
        %v1138 = vmax.f32 %v1089, %v1093
        %v1139 = vmax.f32 %v1090, %v1094
        %v1140 = vmax.f32 %v1091, %v1095
        %v1141 = vmax.f32 %v1096, %v1100
        %v1142 = vmax.f32 %v1097, %v1101
        %v1143 = vmax.f32 %v1098, %v1102
        %v1144 = vmax.f32 %v1099, %v1103
        %v1145 = vmax.f32 %v1113, %v1104
        %v1146 = vmax.f32 %v1114, %v1105
        %v1147 = vmax.f32 %v1115, %v1106
        %v1148 = vmax.f32 %v1116, %v1107
        %v1149 = vmax.f32 %v1117, %v1044
        %v1150 = vmax.f32 %v1118, %v1045
        %v1151 = vmax.f32 %v1119, %v1046
        %v1152 = vmax.f32 %v1120, %v1047
        %v1153 = vmax.f32 %v1121, %v1052
        %v1154 = vmax.f32 %v1122, %v1053
        %v1155 = vmax.f32 %v1123, %v1054
        %v1156 = vmax.f32 %v1124, %v1055
        %v1157 = vmax.f32 %v1125, %v1060
        %v1158 = vmax.f32 %v1126, %v1061
        %v1159 = vmax.f32 %v1127, %v1062
        %v1160 = vmax.f32 %v1128, %v1063
        %v1161 = vmax.f32 %v1129, %v1068
        %v1162 = vmax.f32 %v1130, %v1069
        %v1163 = vmax.f32 %v1131, %v1070
        %v1164 = vmax.f32 %v1132, %v1071
        %v1165 = vmax.f32 %v1133, %v1076
        %v1166 = vmax.f32 %v1134, %v1077
        %v1167 = vmax.f32 %v1135, %v1078
        %v1168 = vmax.f32 %v1136, %v1079
        %v1169 = vmax.f32 %v1137, %v1084
        %v1170 = vmax.f32 %v1138, %v1085
        %v1171 = vmax.f32 %v1139, %v1086
        %v1172 = vmax.f32 %v1140, %v1087
        %v1173 = vmax.f32 %v1141, %v1092
        %v1174 = vmax.f32 %v1142, %v1093
        %v1175 = vmax.f32 %v1143, %v1094
        %v1176 = vmax.f32 %v1144, %v1095
        %v1193 = vrot.slane %v1147, 7
        %v1194 = vrot.slane %v1148, 7
        %v1195 = vsel %vm744, %v1193, %v1194
        %v1196 = vrot.slane %v1151, 7
        %v1197 = vrot.slane %v1152, 7
        %v1198 = vsel %vm744, %v1196, %v1197
        %v1199 = vrot.slane %v1155, 7
        %v1200 = vrot.slane %v1156, 7
        %v1201 = vsel %vm744, %v1199, %v1200
        %v1202 = vrot.slane %v1159, 7
        %v1203 = vrot.slane %v1160, 7
        %v1204 = vsel %vm744, %v1202, %v1203
        %v1205 = vrot.slane %v1163, 7
        %v1206 = vrot.slane %v1164, 7
        %v1207 = vsel %vm744, %v1205, %v1206
        %v1208 = vrot.slane %v1167, 7
        %v1209 = vrot.slane %v1168, 7
        %v1210 = vsel %vm744, %v1208, %v1209
        %v1211 = vrot.slane %v1171, 7
        %v1212 = vrot.slane %v1172, 7
        %v1213 = vsel %vm744, %v1211, %v1212
        %v1214 = vrot.slane %v1175, 7
        %v1215 = vrot.slane %v1176, 7
        %v1216 = vsel %vm744, %v1214, %v1215
        %v1233 = vsel %vm744, 0.0, %v1193
        %v1234 = vsel %vm744, 0.0, %v1196
        %v1235 = vsel %vm744, 0.0, %v1199
        %v1236 = vsel %vm744, 0.0, %v1202
        %v1237 = vsel %vm744, 0.0, %v1205
        %v1238 = vsel %vm744, 0.0, %v1208
        %v1239 = vsel %vm744, 0.0, %v1211
        %v1240 = vsel %vm744, 0.0, %v1214
        %v1241 = vmax.f32 %v1145, %v1147
        %v1242 = vmax.f32 %v1146, %v1148
        %v1243 = vmax.f32 %v1149, %v1151
        %v1244 = vmax.f32 %v1150, %v1152
        %v1245 = vmax.f32 %v1153, %v1155
        %v1246 = vmax.f32 %v1154, %v1156
        %v1247 = vmax.f32 %v1157, %v1159
        %v1248 = vmax.f32 %v1158, %v1160
        %v1249 = vmax.f32 %v1161, %v1163
        %v1250 = vmax.f32 %v1162, %v1164
        %v1251 = vmax.f32 %v1165, %v1167
        %v1252 = vmax.f32 %v1166, %v1168
        %v1253 = vmax.f32 %v1169, %v1171
        %v1254 = vmax.f32 %v1170, %v1172
        %v1255 = vmax.f32 %v1173, %v1175
        %v1256 = vmax.f32 %v1174, %v1176
        %v1257 = vmax.f32 %v1241, %v1233
        %v1258 = vmax.f32 %v1242, %v1195
        %v1259 = vmax.f32 %v1243, %v1234
        %v1260 = vmax.f32 %v1244, %v1198
        %v1261 = vmax.f32 %v1245, %v1235
        %v1262 = vmax.f32 %v1246, %v1201
        %v1263 = vmax.f32 %v1247, %v1236
        %v1264 = vmax.f32 %v1248, %v1204
        %v1265 = vmax.f32 %v1249, %v1237
        %v1266 = vmax.f32 %v1250, %v1207
        %v1267 = vmax.f32 %v1251, %v1238
        %v1268 = vmax.f32 %v1252, %v1210
        %v1269 = vmax.f32 %v1253, %v1239
        %v1270 = vmax.f32 %v1254, %v1213
        %v1271 = vmax.f32 %v1255, %v1240
        %v1272 = vmax.f32 %v1256, %v1216
        %v1273 = vcombine.low %v1257, %v1261
        %v1274 = vcombine.high %v1257, %v1261
        %v1276 = vunpack.c.l.s4 1983009808
        %v1277 = vunpack.c.0.s8 %v1276
        %v1278 = vlaneseq
        %v1279 = vshrl.u32 %v1278, 7
        %v1280 = vsub.s32 %v1277, %v1279
        %v1281 = vrot.slane %v1273, %v1280
        %v1283 = vunpack.c.l.s4 1983009808
        %v1284 = vunpack.c.0.s8 %v1283
        %v1285 = vlaneseq
        %v1286 = vshrl.u32 %v1285, 7
        %v1287 = vsub.s32 %v1284, %v1286
        %v1288 = vrot.slane %v1274, %v1287
        %v1289 = vcombine.low %v1259, %v1263
        %v1290 = vcombine.high %v1259, %v1263
        %v1292 = vunpack.c.l.s4 1983009808
        %v1293 = vunpack.c.0.s8 %v1292
        %v1294 = vlaneseq
        %v1295 = vshrl.u32 %v1294, 7
        %v1296 = vsub.s32 %v1293, %v1295
        %v1297 = vrot.slane %v1289, %v1296
        %v1299 = vunpack.c.l.s4 1983009808
        %v1300 = vunpack.c.0.s8 %v1299
        %v1301 = vlaneseq
        %v1302 = vshrl.u32 %v1301, 7
        %v1303 = vsub.s32 %v1300, %v1302
        %v1304 = vrot.slane %v1290, %v1303
        %v1305 = vcombine.low %v1265, %v1269
        %v1306 = vcombine.high %v1265, %v1269
        %v1308 = vunpack.c.l.s4 1983009808
        %v1309 = vunpack.c.0.s8 %v1308
        %v1310 = vlaneseq
        %v1311 = vshrl.u32 %v1310, 7
        %v1312 = vsub.s32 %v1309, %v1311
        %v1313 = vrot.slane %v1305, %v1312
        %v1315 = vunpack.c.l.s4 1983009808
        %v1316 = vunpack.c.0.s8 %v1315
        %v1317 = vlaneseq
        %v1318 = vshrl.u32 %v1317, 7
        %v1319 = vsub.s32 %v1316, %v1318
        %v1320 = vrot.slane %v1306, %v1319
        %v1321 = vcombine.low %v1267, %v1271
        %v1322 = vcombine.high %v1267, %v1271
        %v1324 = vunpack.c.l.s4 1983009808
        %v1325 = vunpack.c.0.s8 %v1324
        %v1326 = vlaneseq
        %v1327 = vshrl.u32 %v1326, 7
        %v1328 = vsub.s32 %v1325, %v1327
        %v1329 = vrot.slane %v1321, %v1328
        %v1331 = vunpack.c.l.s4 1983009808
        %v1332 = vunpack.c.0.s8 %v1331
        %v1333 = vlaneseq
        %v1334 = vshrl.u32 %v1333, 7
        %v1335 = vsub.s32 %v1332, %v1334
        %v1336 = vrot.slane %v1322, %v1335
        %v1337 = vcombine.low %v1281, %v1297
        %v1338 = vcombine.high %v1281, %v1297
        %v1340 = vunpack.c.l.s4 1934713408
        %v1341 = vunpack.c.0.s8 %v1340
        %v1342 = vlaneseq
        %v1343 = vshrl.u32 %v1342, 7
        %v1344 = vsub.s32 %v1341, %v1343
        %v1345 = vrot.slane %v1337, %v1344
        %v1347 = vunpack.c.l.s4 1934713408
        %v1348 = vunpack.c.0.s8 %v1347
        %v1349 = vlaneseq
        %v1350 = vshrl.u32 %v1349, 7
        %v1351 = vsub.s32 %v1348, %v1350
        %v1352 = vrot.slane %v1338, %v1351
        %v1353 = vcombine.low %v1288, %v1304
        %v1354 = vcombine.high %v1288, %v1304
        %v1356 = vunpack.c.l.s4 1934713408
        %v1357 = vunpack.c.0.s8 %v1356
        %v1358 = vlaneseq
        %v1359 = vshrl.u32 %v1358, 7
        %v1360 = vsub.s32 %v1357, %v1359
        %v1361 = vrot.slane %v1353, %v1360
        %v1363 = vunpack.c.l.s4 1934713408
        %v1364 = vunpack.c.0.s8 %v1363
        %v1365 = vlaneseq
        %v1366 = vshrl.u32 %v1365, 7
        %v1367 = vsub.s32 %v1364, %v1366
        %v1368 = vrot.slane %v1354, %v1367
        %v1369 = vcombine.low %v1313, %v1329
        %v1370 = vcombine.high %v1313, %v1329
        %v1372 = vunpack.c.l.s4 1934713408
        %v1373 = vunpack.c.0.s8 %v1372
        %v1374 = vlaneseq
        %v1375 = vshrl.u32 %v1374, 7
        %v1376 = vsub.s32 %v1373, %v1375
        %v1377 = vrot.slane %v1369, %v1376
        %v1379 = vunpack.c.l.s4 1934713408
        %v1380 = vunpack.c.0.s8 %v1379
        %v1381 = vlaneseq
        %v1382 = vshrl.u32 %v1381, 7
        %v1383 = vsub.s32 %v1380, %v1382
        %v1384 = vrot.slane %v1370, %v1383
        %v1385 = vcombine.low %v1320, %v1336
        %v1386 = vcombine.high %v1320, %v1336
        %v1388 = vunpack.c.l.s4 1934713408
        %v1389 = vunpack.c.0.s8 %v1388
        %v1390 = vlaneseq
        %v1391 = vshrl.u32 %v1390, 7
        %v1392 = vsub.s32 %v1389, %v1391
        %v1393 = vrot.slane %v1385, %v1392
        %v1395 = vunpack.c.l.s4 1934713408
        %v1396 = vunpack.c.0.s8 %v1395
        %v1397 = vlaneseq
        %v1398 = vshrl.u32 %v1397, 7
        %v1399 = vsub.s32 %v1396, %v1398
        %v1400 = vrot.slane %v1386, %v1399
        %v1401 = vcombine.low %v1345, %v1377
        %v1402 = vcombine.high %v1345, %v1377
        %v1403 = vcombine.low %v1352, %v1384
        %v1404 = vcombine.high %v1352, %v1384
        %v1405 = vcombine.low %v1361, %v1393
        %v1406 = vcombine.high %v1361, %v1393
        %v1407 = vcombine.low %v1368, %v1400
        %v1408 = vcombine.high %v1368, %v1400
        %v1409 = vcombine.low %v1258, %v1262
        %v1410 = vcombine.high %v1258, %v1262
        %v1412 = vunpack.c.l.s4 1983009808
        %v1413 = vunpack.c.0.s8 %v1412
        %v1414 = vlaneseq
        %v1415 = vshrl.u32 %v1414, 7
        %v1416 = vsub.s32 %v1413, %v1415
        %v1417 = vrot.slane %v1409, %v1416
        %v1419 = vunpack.c.l.s4 1983009808
        %v1420 = vunpack.c.0.s8 %v1419
        %v1421 = vlaneseq
        %v1422 = vshrl.u32 %v1421, 7
        %v1423 = vsub.s32 %v1420, %v1422
        %v1424 = vrot.slane %v1410, %v1423
        %v1425 = vcombine.low %v1260, %v1264
        %v1426 = vcombine.high %v1260, %v1264
        %v1428 = vunpack.c.l.s4 1983009808
        %v1429 = vunpack.c.0.s8 %v1428
        %v1430 = vlaneseq
        %v1431 = vshrl.u32 %v1430, 7
        %v1432 = vsub.s32 %v1429, %v1431
        %v1433 = vrot.slane %v1425, %v1432
        %v1435 = vunpack.c.l.s4 1983009808
        %v1436 = vunpack.c.0.s8 %v1435
        %v1437 = vlaneseq
        %v1438 = vshrl.u32 %v1437, 7
        %v1439 = vsub.s32 %v1436, %v1438
        %v1440 = vrot.slane %v1426, %v1439
        %v1441 = vcombine.low %v1266, %v1270
        %v1442 = vcombine.high %v1266, %v1270
        %v1444 = vunpack.c.l.s4 1983009808
        %v1445 = vunpack.c.0.s8 %v1444
        %v1446 = vlaneseq
        %v1447 = vshrl.u32 %v1446, 7
        %v1448 = vsub.s32 %v1445, %v1447
        %v1449 = vrot.slane %v1441, %v1448
        %v1451 = vunpack.c.l.s4 1983009808
        %v1452 = vunpack.c.0.s8 %v1451
        %v1453 = vlaneseq
        %v1454 = vshrl.u32 %v1453, 7
        %v1455 = vsub.s32 %v1452, %v1454
        %v1456 = vrot.slane %v1442, %v1455
        %v1457 = vcombine.low %v1268, %v1272
        %v1458 = vcombine.high %v1268, %v1272
        %v1460 = vunpack.c.l.s4 1983009808
        %v1461 = vunpack.c.0.s8 %v1460
        %v1462 = vlaneseq
        %v1463 = vshrl.u32 %v1462, 7
        %v1464 = vsub.s32 %v1461, %v1463
        %v1465 = vrot.slane %v1457, %v1464
        %v1467 = vunpack.c.l.s4 1983009808
        %v1468 = vunpack.c.0.s8 %v1467
        %v1469 = vlaneseq
        %v1470 = vshrl.u32 %v1469, 7
        %v1471 = vsub.s32 %v1468, %v1470
        %v1472 = vrot.slane %v1458, %v1471
        %v1473 = vcombine.low %v1417, %v1433
        %v1474 = vcombine.high %v1417, %v1433
        %v1476 = vunpack.c.l.s4 1934713408
        %v1477 = vunpack.c.0.s8 %v1476
        %v1478 = vlaneseq
        %v1479 = vshrl.u32 %v1478, 7
        %v1480 = vsub.s32 %v1477, %v1479
        %v1481 = vrot.slane %v1473, %v1480
        %v1483 = vunpack.c.l.s4 1934713408
        %v1484 = vunpack.c.0.s8 %v1483
        %v1485 = vlaneseq
        %v1486 = vshrl.u32 %v1485, 7
        %v1487 = vsub.s32 %v1484, %v1486
        %v1488 = vrot.slane %v1474, %v1487
        %v1489 = vcombine.low %v1424, %v1440
        %v1490 = vcombine.high %v1424, %v1440
        %v1492 = vunpack.c.l.s4 1934713408
        %v1493 = vunpack.c.0.s8 %v1492
        %v1494 = vlaneseq
        %v1495 = vshrl.u32 %v1494, 7
        %v1496 = vsub.s32 %v1493, %v1495
        %v1497 = vrot.slane %v1489, %v1496
        %v1499 = vunpack.c.l.s4 1934713408
        %v1500 = vunpack.c.0.s8 %v1499
        %v1501 = vlaneseq
        %v1502 = vshrl.u32 %v1501, 7
        %v1503 = vsub.s32 %v1500, %v1502
        %v1504 = vrot.slane %v1490, %v1503
        %v1505 = vcombine.low %v1449, %v1465
        %v1506 = vcombine.high %v1449, %v1465
        %v1508 = vunpack.c.l.s4 1934713408
        %v1509 = vunpack.c.0.s8 %v1508
        %v1510 = vlaneseq
        %v1511 = vshrl.u32 %v1510, 7
        %v1512 = vsub.s32 %v1509, %v1511
        %v1513 = vrot.slane %v1505, %v1512
        %v1515 = vunpack.c.l.s4 1934713408
        %v1516 = vunpack.c.0.s8 %v1515
        %v1517 = vlaneseq
        %v1518 = vshrl.u32 %v1517, 7
        %v1519 = vsub.s32 %v1516, %v1518
        %v1520 = vrot.slane %v1506, %v1519
        %v1521 = vcombine.low %v1456, %v1472
        %v1522 = vcombine.high %v1456, %v1472
        %v1524 = vunpack.c.l.s4 1934713408
        %v1525 = vunpack.c.0.s8 %v1524
        %v1526 = vlaneseq
        %v1527 = vshrl.u32 %v1526, 7
        %v1528 = vsub.s32 %v1525, %v1527
        %v1529 = vrot.slane %v1521, %v1528
        %v1531 = vunpack.c.l.s4 1934713408
        %v1532 = vunpack.c.0.s8 %v1531
        %v1533 = vlaneseq
        %v1534 = vshrl.u32 %v1533, 7
        %v1535 = vsub.s32 %v1532, %v1534
        %v1536 = vrot.slane %v1522, %v1535
        %v1537 = vcombine.low %v1481, %v1513
        %v1538 = vcombine.high %v1481, %v1513
        %v1539 = vcombine.low %v1488, %v1520
        %v1540 = vcombine.high %v1488, %v1520
        %v1541 = vcombine.low %v1497, %v1529
        %v1542 = vcombine.high %v1497, %v1529
        %v1543 = vcombine.low %v1504, %v1536
        %v1544 = vcombine.high %v1504, %v1536
        %1546 = vrot.lane.b32.xlu0 %v1402, 64
        %v1547 = vpop.permute.xlu0 %1546
        %1550 = vrot.lane.b32.xlu0 %v1404, 64
        %v1551 = vpop.permute.xlu0 %1550
        %1554 = vrot.lane.b32.xlu0 %v1406, 64
        %v1555 = vpop.permute.xlu0 %1554
        %1558 = vrot.lane.b32.xlu0 %v1408, 64
        %v1559 = vpop.permute.xlu0 %1558
        %1562 = vrot.lane.b32.xlu0 %v1538, 64
        %v1563 = vpop.permute.xlu0 %1562
        %1566 = vrot.lane.b32.xlu0 %v1540, 64
        %v1567 = vpop.permute.xlu0 %1566
        %1570 = vrot.lane.b32.xlu0 %v1542, 64
        %v1571 = vpop.permute.xlu0 %1570
        %1574 = vrot.lane.b32.xlu0 %v1544, 64
        %v1575 = vpop.permute.xlu0 %1574
        %v1577 = vsel %vm1108, %v1401, %v1547
        %v1578 = vsel %vm1108, %v1403, %v1551
        %v1579 = vsel %vm1108, %v1405, %v1555
        %v1580 = vsel %vm1108, %v1407, %v1559
        %v1581 = vsel %vm1108, %v1537, %v1563
        %v1582 = vsel %vm1108, %v1539, %v1567
        %v1583 = vsel %vm1108, %v1541, %v1571
        %v1584 = vsel %vm1108, %v1543, %v1575
        %1585 = vst [vmem:[%s190] sm:$0xff] %v1577
        %1586 = vst [vmem:[%s190 + $0x8] sm:$0xff] %v1578
        %1587 = vst [vmem:[%s190 + $0x10] sm:$0xff] %v1579
        %1588 = vst [vmem:[%s190 + $0x18] sm:$0xff] %v1580
        %1589 = vst [vmem:[%s190 + $0x20] sm:$0xff] %v1581
        %1590 = vst [vmem:[%s190 + $0x28] sm:$0xff] %v1582
        %1591 = vst [vmem:[%s190 + $0x30] sm:$0xff] %v1583
        %1592 = vst [vmem:[%s190 + $0x38] sm:$0xff] %v1584
        %s1593 = sand.u32 %s109, 1
        %s1594 = scalar_lea.sflag [#allocation4], %s1593
        %s1595 = sand.u32 %s109, 1
        %s1596 = smul.addr %s1595, 64
        %s1597 = scalar_lea.vmem [#allocation3], %s1596
        // Predicated region
        $region37: #{tpu_custom_call.1} parent=31 // pred_check
          %p1598 = pneg %p119
        $region38: #{tpu_custom_call.1} parent=31 // pred_check_branch
          %1600 = sbr.rel (%p1598) target = $region40
        $region39: #{tpu_custom_call.1} parent=31 // pred_region
          %s1602 = ssub.s32 1024, 1024
          %1603 = vsyncadd %s1594, %s1602
          %s1604 = smul.addr %s22, 8
          %s1605 = smul.addr %s21, 16
          %s1606 = sadd.s32 %s1604, %s1605
          %s1607 = smul.addr %s1606, 128
          %s1608 = scalar_lea.hbm %s3, %s1607
          %s1610 = sshll.u32 %s1597, 4
          %s1611 = int_to_ptr.vmem [resolvable:$true] %s1610
          %1613 = dma.vmem_to_hbm [thread:$0]  %s1611, 1024, %s1608, %s1594
        $region40: #{tpu_custom_call.1} parent=31 // pred_fallthru
          _
      $region32: #{tpu_custom_call.1} parent=5 // pred_fallthru
        _
      %p1614 = scmp.le.s32.totalorder 2, %s12
      // Predicated region
      $region41: #{tpu_custom_call.1} parent=5 // pred_check
        %p1615 = pneg %p1614
      $region42: #{tpu_custom_call.1} parent=5 // pred_check_branch
        %1617 = sbr.rel (%p1615) target = $region44
      $region43: #{tpu_custom_call.1} parent=5 // pred_region
        %s1618 = ssub.s32 %s12, 2
        // Predicated region
        $region45: #{tpu_custom_call.1} parent=43 // pred_check
          %p1619 = pneg %p125
        $region46: #{tpu_custom_call.1} parent=43 // pred_check_branch
          %1621 = sbr.rel (%p1619) target = $region48
        $region47: #{tpu_custom_call.1} parent=43 // pred_region
          %s1622 = sand.u32 %s110, 1
          %s1623 = scalar_lea.sflag [#allocation4], %s1622
          %s1624 = sand.u32 %s110, 1
          %s1625 = smul.addr %s1624, 64
          %s1626 = scalar_lea.vmem [#allocation3], %s1625
          %1627 = dma.done %s1623, 1024
        $region48: #{tpu_custom_call.1} parent=43 // pred_fallthru
          _
      $region44: #{tpu_custom_call.1} parent=5 // pred_fallthru
        _
    $region6: #{tpu_custom_call.1} parent=1 // loop_footer
      %s16 = sadd.s32 1, %s12
    $region7: #{tpu_custom_call.1} parent=1 // loop_footer_branch
      %11 = sbr.rel target = $region3
    $region8: #{tpu_custom_call.1} parent=1 // loop_exit
      _
    %1628 = vsyncpa [#allocation4], 1
    %s1629 = scalar_lea.sflag [#allocation4], 1
    %1630 = vsyncpa %s1629, 1

</llo_original>
